<compile_context>
chip_gen: v6e
topology: v6e:2x2x1
jax: 0.10.0
libtpu: 0.0.40
codegen_flags: <defaults>
</compile_context>

<pallas_src>
import jax
import jax.numpy as jnp
from jax.experimental import pallas as pl
from jax.experimental.pallas import tpu as pltpu

NUM_CLASSES = 5
CLASS_PAD = 128                        # lane-dense padded class dimension
MAX_TILE_B = 256                       # keeps f32 accumulator <= 32 vregs
VMEM_BUDGET_BYTES = 48 * 1024 * 1024   # ~75% of v7x 64 MiB; fits v5e/v6e too


def _round_up(x, m):
    return (x + m - 1) // m * m


# ---------------------------------------------------------------------------
# Kernel: 3 accumulated matmuls (f32 in -> bf16 cast in VMEM -> MXU with f32
# accumulation) + single fused bias add.
# ---------------------------------------------------------------------------
def _late_fusion_kernel(xv_ref, xa_ref, xt_ref,
                        wv_ref, wa_ref, wt_ref, b_ref,
                        out_ref):
    acc = jnp.dot(xv_ref[...].astype(jnp.bfloat16), wv_ref[...],
                  preferred_element_type=jnp.float32)
    acc += jnp.dot(xa_ref[...].astype(jnp.bfloat16), wa_ref[...],
                   preferred_element_type=jnp.float32)
    acc += jnp.dot(xt_ref[...].astype(jnp.bfloat16), wt_ref[...],
                   preferred_element_type=jnp.float32)
    out_ref[...] = acc + b_ref[...]


# ---------------------------------------------------------------------------
# Parameters.
#   _make_params: raw (un-fused) heads, mirroring the four frozen sub-modules.
#   _fuse_params: fold VAT + 0.25 mean + biases into per-modality bf16 weights,
#                 zero-padded to a 128-wide class dimension.  Done once,
#                 offline, because the heads are frozen.
# ---------------------------------------------------------------------------
def _make_params(key, d_vis, d_aud, d_txt):
    d_vat = d_vis + d_aud + d_txt
    ks = jax.random.split(key, 8)
    scale = 0.02
    return {
        "wv":   scale * jax.random.normal(ks[0], (d_vis, NUM_CLASSES), jnp.float32),
        "bv":   scale * jax.random.normal(ks[1], (1, NUM_CLASSES), jnp.float32),
        "wa":   scale * jax.random.normal(ks[2], (d_aud, NUM_CLASSES), jnp.float32),
        "ba":   scale * jax.random.normal(ks[3], (1, NUM_CLASSES), jnp.float32),
        "wt":   scale * jax.random.normal(ks[4], (d_txt, NUM_CLASSES), jnp.float32),
        "bt":   scale * jax.random.normal(ks[5], (1, NUM_CLASSES), jnp.float32),
        "wvat": scale * jax.random.normal(ks[6], (d_vat, NUM_CLASSES), jnp.float32),
        "bvat": scale * jax.random.normal(ks[7], (1, NUM_CLASSES), jnp.float32),
    }


def _fuse_params(params, d_vis, d_aud, d_txt):
    wvat = params["wvat"]
    wv = 0.25 * (params["wv"] + wvat[:d_vis])
    wa = 0.25 * (params["wa"] + wvat[d_vis:d_vis + d_aud])
    wt = 0.25 * (params["wt"] + wvat[d_vis + d_aud:])
    b = 0.25 * (params["bv"] + params["ba"] + params["bt"] + params["bvat"])

    def pad_c(x):  # zero-pad class dim 5 -> 128 (lane-dense output path)
        return jnp.pad(x, ((0, 0), (0, CLASS_PAD - NUM_CLASSES)))

    return {
        "wv": pad_c(wv).astype(jnp.bfloat16),
        "wa": pad_c(wa).astype(jnp.bfloat16),
        "wt": pad_c(wt).astype(jnp.bfloat16),
        "b":  pad_c(b).astype(jnp.float32),
    }


# ---------------------------------------------------------------------------
# Wrapper: flatten modalities (free reshapes only), batch-tile, call kernel.
# ---------------------------------------------------------------------------
def vision_audio_text_concat(image, audio, text, fused):
    """Forward pass of visionAudioTextConcat.

    image: [B, C, H, W] float32 (NCHW)
    audio: [B, Da]      float32
    text:  [B, S, H]    float32
    fused: output of _fuse_params
    returns: [B, NUM_CLASSES] float32 (per-sample mean of the 4 frozen heads)
    """
    b = image.shape[0]
    xv = image.reshape(b, -1)          # stay f32: no wrapper-side bf16 copy pass
    xa = audio.reshape(b, -1)
    xt = text.reshape(b, -1)
    dv, da, dt = xv.shape[1], xa.shape[1], xt.shape[1]
    d_total = dv + da + dt

    # ---- batch-tile selection (VMEM-budgeted, multiple of 16) ---------------
    # Per-row VMEM: 2x f32 activation buffers + in-kernel bf16 casts +
    # 2x f32 output buffers + f32 accumulator.  Weights counted conservatively
    # as double-buffered (covers the fallback path).
    weight_bytes = 2 * d_total * CLASS_PAD * 2 + 2 * CLASS_PAD * 4
    per_row_bytes = 2 * d_total * 4 + d_total * 2 + 3 * CLASS_PAD * 4
    cap_rows = max(VMEM_BUDGET_BYTES - weight_bytes, per_row_bytes) // per_row_bytes
    tile_b_vmem = max(16, cap_rows // 16 * 16)

    b16 = _round_up(b, 16)
    tile_b = min(MAX_TILE_B, b16, tile_b_vmem)
    if b16 >= 32:
        # Guarantee >= 2 grid steps so v7x's second TensorCore gets a share
        # of the "parallel" batch axis (no-op cost on single-TC v5e/v6e).
        tile_b = min(tile_b, _round_up(pl.cdiv(b, 2), 16))
    tile_b = max(tile_b, 16)

    grid = (pl.cdiv(b, tile_b),)   # last block may overhang; OOB rows dropped

    flops = 2 * b * d_total * CLASS_PAD
    bytes_accessed = (b * d_total * 4              # f32 activations (streamed once)
                      + d_total * CLASS_PAD * 2    # bf16 fused weights
                      + CLASS_PAD * 4              # fused bias
                      + b * CLASS_PAD * 4)         # f32 output
    cost = pl.CostEstimate(flops=flops, transcendentals=0,
                           bytes_accessed=bytes_accessed)

    def _run(single_buffer_weights):
        wkw = {}
        if single_buffer_weights and hasattr(pl, "Buffered"):
            # Constant index_map -> single-buffer the resident weights/bias.
            wkw["pipeline_mode"] = pl.Buffered(1)
        in_specs = [
            pl.BlockSpec((tile_b, dv), lambda i: (i, 0)),     # vision feats
            pl.BlockSpec((tile_b, da), lambda i: (i, 0)),     # audio feats
            pl.BlockSpec((tile_b, dt), lambda i: (i, 0)),     # text feats
            pl.BlockSpec((dv, CLASS_PAD), lambda i: (0, 0), **wkw),  # weights
            pl.BlockSpec((da, CLASS_PAD), lambda i: (0, 0), **wkw),
            pl.BlockSpec((dt, CLASS_PAD), lambda i: (0, 0), **wkw),
            pl.BlockSpec((1, CLASS_PAD), lambda i: (0, 0), **wkw),   # fused bias
        ]
        return pl.pallas_call(
            _late_fusion_kernel,
            out_shape=jax.ShapeDtypeStruct((b, CLASS_PAD), jnp.float32),
            grid=grid,
            in_specs=in_specs,
            out_specs=pl.BlockSpec((tile_b, CLASS_PAD), lambda i: (i, 0)),
            compiler_params=pltpu.CompilerParams(
                dimension_semantics=("parallel",),
                vmem_limit_bytes=VMEM_BUDGET_BYTES),
            cost_estimate=cost,
        )(xv, xa, xt, fused["wv"], fused["wa"], fused["wt"], fused["b"])

    try:
        out = _run(True)
    except Exception:
        # Mosaic/jax version without single-buffer pipeline_mode support:
        # identical math, default double-buffered weights.
        out = _run(False)

    return out[:, :NUM_CLASSES]


# ---------------------------------------------------------------------------
# Pure-JAX reference mirroring the literal PyTorch forward (per-sample mean
# of the four heads), computed in f32 with the RAW (un-fused) parameters.
# ---------------------------------------------------------------------------
def _reference(image, audio, text, params):
    b = image.shape[0]
    xv = image.reshape(b, -1)
    xa = audio.reshape(b, -1)
    xt = text.reshape(b, -1)
    xvat = jnp.concatenate([xv, xa, xt], axis=-1)
    vis = xv @ params["wv"] + params["bv"]
    aud = xa @ params["wa"] + params["ba"]
    txt = xt @ params["wt"] + params["bt"]
    vat = xvat @ params["wvat"] + params["bvat"]
    return (vis + vat + aud + txt) / 4.0


if __name__ == "__main__":
    B, C, H, W = 2, 4, 16, 16     # image  [2, 4, 16, 16]
    DA = 128                      # audio  [2, 128]
    S, HID = 8, 32                # text   [2, 8, 32]

    key = jax.random.PRNGKey(0)
    k_img, k_aud, k_txt, k_par = jax.random.split(key, 4)

    image = jax.random.normal(k_img, (B, C, H, W), jnp.float32)
    audio = jax.random.normal(k_aud, (B, DA), jnp.float32)
    text = jax.random.normal(k_txt, (B, S, HID), jnp.float32)

    d_vis, d_aud, d_txt = C * H * W, DA, S * HID
    params = _make_params(k_par, d_vis, d_aud, d_txt)
    fused = _fuse_params(params, d_vis, d_aud, d_txt)

    out = vision_audio_text_concat(image, audio, text, fused)
    out = jax.block_until_ready(out)

    ref = _reference(image, audio, text, params)
    assert out.shape == (B, NUM_CLASSES)
    # bf16 weights / in-kernel bf16 activation cast with f32 accumulation.
    assert jnp.allclose(out, ref, atol=2e-2, rtol=2e-2), (
        f"max abs err {jnp.max(jnp.abs(out - ref))}")

    print("KERNEL_OK")
</pallas_src>

<mosaic_0001>
module attributes {stable_mosaic.version = 11 : i64} {
  func.func @_late_fusion_kernel(%arg0: i32, %arg1: memref<16x1024xf32, #tpu.memory_space<vmem>>, %arg2: memref<16x128xf32, #tpu.memory_space<vmem>>, %arg3: memref<16x256xf32, #tpu.memory_space<vmem>>, %arg4: memref<1024x128xbf16, #tpu.memory_space<vmem>>, %arg5: memref<128x128xbf16, #tpu.memory_space<vmem>>, %arg6: memref<256x128xbf16, #tpu.memory_space<vmem>>, %arg7: memref<1x128xf32, #tpu.memory_space<vmem>>, %arg8: memref<16x128xf32, #tpu.memory_space<vmem>>) attributes {dimension_semantics = [#tpu.dimension_semantics<parallel>], iteration_bounds = array<i64: 1>, scalar_prefetch = 0 : i64, scratch_operands = 0 : i64, tpu.core_type = #tpu.core_type<tc>, window_params = [{transform_indices = @transform_0, window_bounds = array<i64: 16, 1024>}, {transform_indices = @transform_1, window_bounds = array<i64: 16, 128>}, {transform_indices = @transform_2, window_bounds = array<i64: 16, 256>}, {pipeline_mode = #tpu.pipeline_mode<synchronous>, transform_indices = @transform_3, window_bounds = array<i64: 1024, 128>}, {pipeline_mode = #tpu.pipeline_mode<synchronous>, transform_indices = @transform_4, window_bounds = array<i64: 128, 128>}, {pipeline_mode = #tpu.pipeline_mode<synchronous>, transform_indices = @transform_5, window_bounds = array<i64: 256, 128>}, {pipeline_mode = #tpu.pipeline_mode<synchronous>, transform_indices = @transform_6, window_bounds = array<i64: 1, 128>}, {transform_indices = @transform_7, window_bounds = array<i64: 16, 128>}]} {
    %c0 = arith.constant 0 : index
    %c0_0 = arith.constant 0 : index
    %0 = vector.load %arg1[%c0, %c0_0] : memref<16x1024xf32, #tpu.memory_space<vmem>>, vector<16x1024xf32>
    %1 = arith.truncf %0 : vector<16x1024xf32> to vector<16x1024xbf16>
    %c0_1 = arith.constant 0 : index
    %c0_2 = arith.constant 0 : index
    %2 = vector.load %arg4[%c0_1, %c0_2] : memref<1024x128xbf16, #tpu.memory_space<vmem>>, vector<1024x128xbf16>
    %cst = arith.constant dense<0.000000e+00> : vector<16x128xf32>
    %3 = tpu.matmul %1, %2, %cst {dimension_numbers = #tpu.dot_dimension_numbers<[1], [0], [0], [1], [0, 0, 1, 1], [], []>} : vector<16x1024xbf16>, vector<1024x128xbf16>, vector<16x128xf32> -> vector<16x128xf32>
    %c0_3 = arith.constant 0 : index
    %c0_4 = arith.constant 0 : index
    %4 = vector.load %arg2[%c0_3, %c0_4] : memref<16x128xf32, #tpu.memory_space<vmem>>, vector<16x128xf32>
    %5 = arith.truncf %4 : vector<16x128xf32> to vector<16x128xbf16>
    %c0_5 = arith.constant 0 : index
    %c0_6 = arith.constant 0 : index
    %6 = vector.load %arg5[%c0_5, %c0_6] : memref<128x128xbf16, #tpu.memory_space<vmem>>, vector<128x128xbf16>
    %cst_7 = arith.constant dense<0.000000e+00> : vector<16x128xf32>
    %7 = tpu.matmul %5, %6, %cst_7 {dimension_numbers = #tpu.dot_dimension_numbers<[1], [0], [0], [1], [0, 0, 1, 1], [], []>} : vector<16x128xbf16>, vector<128x128xbf16>, vector<16x128xf32> -> vector<16x128xf32>
    %8 = arith.addf %3, %7 : vector<16x128xf32>
    %c0_8 = arith.constant 0 : index
    %c0_9 = arith.constant 0 : index
    %9 = vector.load %arg3[%c0_8, %c0_9] : memref<16x256xf32, #tpu.memory_space<vmem>>, vector<16x256xf32>
    %10 = arith.truncf %9 : vector<16x256xf32> to vector<16x256xbf16>
    %c0_10 = arith.constant 0 : index
    %c0_11 = arith.constant 0 : index
    %11 = vector.load %arg6[%c0_10, %c0_11] : memref<256x128xbf16, #tpu.memory_space<vmem>>, vector<256x128xbf16>
    %cst_12 = arith.constant dense<0.000000e+00> : vector<16x128xf32>
    %12 = tpu.matmul %10, %11, %cst_12 {dimension_numbers = #tpu.dot_dimension_numbers<[1], [0], [0], [1], [0, 0, 1, 1], [], []>} : vector<16x256xbf16>, vector<256x128xbf16>, vector<16x128xf32> -> vector<16x128xf32>
    %13 = arith.addf %8, %12 : vector<16x128xf32>
    %c0_13 = arith.constant 0 : index
    %c0_14 = arith.constant 0 : index
    %14 = vector.load %arg7[%c0_13, %c0_14] : memref<1x128xf32, #tpu.memory_space<vmem>>, vector<1x128xf32>
    %15 = vector.broadcast %14 : vector<1x128xf32> to vector<16x128xf32>
    %16 = arith.addf %13, %15 : vector<16x128xf32>
    %c0_15 = arith.constant 0 : index
    %c0_16 = arith.constant 0 : index
    %17 = vector.load %arg8[%c0_15, %c0_16] : memref<16x128xf32, #tpu.memory_space<vmem>>, vector<16x128xf32>
    tpu.vector_store %arg8[%c0_15, %c0_16], %16 {strides = array<i32>} : memref<16x128xf32, #tpu.memory_space<vmem>>, vector<16x128xf32>,
    return
  }
  func.func @transform_0(%arg0: i32) -> (i32, i32) {
    %c0_i32 = arith.constant 0 : i32
    %c0_i32_0 = arith.constant 0 : i32
    return %arg0, %c0_i32 : i32, i32
  }
  func.func @transform_1(%arg0: i32) -> (i32, i32) {
    %c0_i32 = arith.constant 0 : i32
    %c0_i32_0 = arith.constant 0 : i32
    return %arg0, %c0_i32 : i32, i32
  }
  func.func @transform_2(%arg0: i32) -> (i32, i32) {
    %c0_i32 = arith.constant 0 : i32
    %c0_i32_0 = arith.constant 0 : i32
    return %arg0, %c0_i32 : i32, i32
  }
  func.func @transform_3(%arg0: i32) -> (i32, i32) {
    %c0_i32 = arith.constant 0 : i32
    %c0_i32_0 = arith.constant 0 : i32
    %c0_i32_1 = arith.constant 0 : i32
    return %c0_i32, %c0_i32_0 : i32, i32
  }
  func.func @transform_4(%arg0: i32) -> (i32, i32) {
    %c0_i32 = arith.constant 0 : i32
    %c0_i32_0 = arith.constant 0 : i32
    %c0_i32_1 = arith.constant 0 : i32
    return %c0_i32, %c0_i32_0 : i32, i32
  }
  func.func @transform_5(%arg0: i32) -> (i32, i32) {
    %c0_i32 = arith.constant 0 : i32
    %c0_i32_0 = arith.constant 0 : i32
    %c0_i32_1 = arith.constant 0 : i32
    return %c0_i32, %c0_i32_0 : i32, i32
  }
  func.func @transform_6(%arg0: i32) -> (i32, i32) {
    %c0_i32 = arith.constant 0 : i32
    %c0_i32_0 = arith.constant 0 : i32
    %c0_i32_1 = arith.constant 0 : i32
    return %c0_i32, %c0_i32_0 : i32, i32
  }
  func.func @transform_7(%arg0: i32) -> (i32, i32) {
    %c0_i32 = arith.constant 0 : i32
    %c0_i32_0 = arith.constant 0 : i32
    return %arg0, %c0_i32 : i32, i32
  }
}

module attributes {stable_mosaic.version = 11 : i64} {
  func.func @_late_fusion_kernel(%arg0: i32, %arg1: memref<16x1024xf32, #tpu.memory_space<vmem>>, %arg2: memref<16x128xf32, #tpu.memory_space<vmem>>, %arg3: memref<16x256xf32, #tpu.memory_space<vmem>>, %arg4: memref<1024x128xbf16, #tpu.memory_space<vmem>>, %arg5: memref<128x128xbf16, #tpu.memory_space<vmem>>, %arg6: memref<256x128xbf16, #tpu.memory_space<vmem>>, %arg7: memref<1x128xf32, #tpu.memory_space<vmem>>, %arg8: memref<16x128xf32, #tpu.memory_space<vmem>>) attributes {dimension_semantics = [#tpu.dimension_semantics<parallel>], iteration_bounds = array<i64: 1>, scalar_prefetch = 0 : i64, scratch_operands = 0 : i64, tpu.core_type = #tpu.core_type<tc>, window_params = [{transform_indices = @transform_0, window_bounds = array<i64: 16, 1024>}, {transform_indices = @transform_1, window_bounds = array<i64: 16, 128>}, {transform_indices = @transform_2, window_bounds = array<i64: 16, 256>}, {pipeline_mode = #tpu.pipeline_mode<synchronous>, transform_indices = @transform_3, window_bounds = array<i64: 1024, 128>}, {pipeline_mode = #tpu.pipeline_mode<synchronous>, transform_indices = @transform_4, window_bounds = array<i64: 128, 128>}, {pipeline_mode = #tpu.pipeline_mode<synchronous>, transform_indices = @transform_5, window_bounds = array<i64: 256, 128>}, {pipeline_mode = #tpu.pipeline_mode<synchronous>, transform_indices = @transform_6, window_bounds = array<i64: 1, 128>}, {transform_indices = @transform_7, window_bounds = array<i64: 16, 128>}]} {
    %c0 = arith.constant 0 : index
    %c0_0 = arith.constant 0 : index
    %0 = vector.load %arg1[%c0, %c0_0] : memref<16x1024xf32, #tpu.memory_space<vmem>>, vector<16x1024xf32>
    %1 = arith.truncf %0 : vector<16x1024xf32> to vector<16x1024xbf16>
    %c0_1 = arith.constant 0 : index
    %c0_2 = arith.constant 0 : index
    %2 = vector.load %arg4[%c0_1, %c0_2] : memref<1024x128xbf16, #tpu.memory_space<vmem>>, vector<1024x128xbf16>
    %cst = arith.constant dense<0.000000e+00> : vector<16x128xf32>
    %3 = tpu.matmul %1, %2, %cst {dimension_numbers = #tpu.dot_dimension_numbers<[1], [0], [0], [1], [0, 0, 1, 1], [], []>} : vector<16x1024xbf16>, vector<1024x128xbf16>, vector<16x128xf32> -> vector<16x128xf32>
    %c0_3 = arith.constant 0 : index
    %c0_4 = arith.constant 0 : index
    %4 = vector.load %arg2[%c0_3, %c0_4] : memref<16x128xf32, #tpu.memory_space<vmem>>, vector<16x128xf32>
    %5 = arith.truncf %4 : vector<16x128xf32> to vector<16x128xbf16>
    %c0_5 = arith.constant 0 : index
    %c0_6 = arith.constant 0 : index
    %6 = vector.load %arg5[%c0_5, %c0_6] : memref<128x128xbf16, #tpu.memory_space<vmem>>, vector<128x128xbf16>
    %cst_7 = arith.constant dense<0.000000e+00> : vector<16x128xf32>
    %7 = tpu.matmul %5, %6, %cst_7 {dimension_numbers = #tpu.dot_dimension_numbers<[1], [0], [0], [1], [0, 0, 1, 1], [], []>} : vector<16x128xbf16>, vector<128x128xbf16>, vector<16x128xf32> -> vector<16x128xf32>
    %8 = arith.addf %3, %7 : vector<16x128xf32>
    %c0_8 = arith.constant 0 : index
    %c0_9 = arith.constant 0 : index
    %9 = vector.load %arg3[%c0_8, %c0_9] : memref<16x256xf32, #tpu.memory_space<vmem>>, vector<16x256xf32>
    %10 = arith.truncf %9 : vector<16x256xf32> to vector<16x256xbf16>
    %c0_10 = arith.constant 0 : index
    %c0_11 = arith.constant 0 : index
    %11 = vector.load %arg6[%c0_10, %c0_11] : memref<256x128xbf16, #tpu.memory_space<vmem>>, vector<256x128xbf16>
    %cst_12 = arith.constant dense<0.000000e+00> : vector<16x128xf32>
    %12 = tpu.matmul %10, %11, %cst_12 {dimension_numbers = #tpu.dot_dimension_numbers<[1], [0], [0], [1], [0, 0, 1, 1], [], []>} : vector<16x256xbf16>, vector<256x128xbf16>, vector<16x128xf32> -> vector<16x128xf32>
    %13 = arith.addf %8, %12 : vector<16x128xf32>
    %c0_13 = arith.constant 0 : index
    %c0_14 = arith.constant 0 : index
    %14 = vector.load %arg7[%c0_13, %c0_14] : memref<1x128xf32, #tpu.memory_space<vmem>>, vector<1x128xf32>
    %15 = vector.broadcast %14 : vector<1x128xf32> to vector<16x128xf32>
    %16 = arith.addf %13, %15 : vector<16x128xf32>
    %c0_15 = arith.constant 0 : index
    %c0_16 = arith.constant 0 : index
    %17 = vector.load %arg8[%c0_15, %c0_16] : memref<16x128xf32, #tpu.memory_space<vmem>>, vector<16x128xf32>
    tpu.vector_store %arg8[%c0_15, %c0_16], %16 {strides = array<i32>} : memref<16x128xf32, #tpu.memory_space<vmem>>, vector<16x128xf32>,
    return
  }
  func.func @transform_0(%arg0: i32) -> (i32, i32) {
    %c0_i32 = arith.constant 0 : i32
    %c0_i32_0 = arith.constant 0 : i32
    return %arg0, %c0_i32 : i32, i32
  }
  func.func @transform_1(%arg0: i32) -> (i32, i32) {
    %c0_i32 = arith.constant 0 : i32
    %c0_i32_0 = arith.constant 0 : i32
    return %arg0, %c0_i32 : i32, i32
  }
  func.func @transform_2(%arg0: i32) -> (i32, i32) {
    %c0_i32 = arith.constant 0 : i32
    %c0_i32_0 = arith.constant 0 : i32
    return %arg0, %c0_i32 : i32, i32
  }
  func.func @transform_3(%arg0: i32) -> (i32, i32) {
    %c0_i32 = arith.constant 0 : i32
    %c0_i32_0 = arith.constant 0 : i32
    %c0_i32_1 = arith.constant 0 : i32
    return %c0_i32, %c0_i32_0 : i32, i32
  }
  func.func @transform_4(%arg0: i32) -> (i32, i32) {
    %c0_i32 = arith.constant 0 : i32
    %c0_i32_0 = arith.constant 0 : i32
    %c0_i32_1 = arith.constant 0 : i32
    return %c0_i32, %c0_i32_0 : i32, i32
  }
  func.func @transform_5(%arg0: i32) -> (i32, i32) {
    %c0_i32 = arith.constant 0 : i32
    %c0_i32_0 = arith.constant 0 : i32
    %c0_i32_1 = arith.constant 0 : i32
    return %c0_i32, %c0_i32_0 : i32, i32
  }
  func.func @transform_6(%arg0: i32) -> (i32, i32) {
    %c0_i32 = arith.constant 0 : i32
    %c0_i32_0 = arith.constant 0 : i32
    %c0_i32_1 = arith.constant 0 : i32
    return %c0_i32, %c0_i32_0 : i32, i32
  }
  func.func @transform_7(%arg0: i32) -> (i32, i32) {
    %c0_i32 = arith.constant 0 : i32
    %c0_i32_0 = arith.constant 0 : i32
    return %arg0, %c0_i32 : i32, i32
  }
}

</mosaic_0001>

<llo_original>
// kernel: tpu_custom_call.1
$region0: #{tpu_custom_call.1}
  #allocation0 [shape = 'u32[]', space=smem, size = 0x4, offset = 0x4, fixed_abs, tag = 'smem constant byte address 0x4 - core index']
  #allocation1 [shape = 'u32[144,128]{1,0:T(1,128)}', space=vmem, size = 0x12000, scoped, tag = 'internal scratch']
  %s0 = inlined_call_operand.hbm [shape: f32[2,1024], index: 0, kind: input, shape index: {}]
  %s1 = inlined_call_operand.hbm [shape: f32[2,128], index: 1, kind: input, shape index: {}]
  %s2 = inlined_call_operand.hbm [shape: f32[2,256], index: 2, kind: input, shape index: {}]
  %s3 = inlined_call_operand.hbm [shape: bf16[1024,128], index: 3, kind: input, shape index: {}]
  %s4 = inlined_call_operand.hbm [shape: bf16[128,128], index: 4, kind: input, shape index: {}]
  %s5 = inlined_call_operand.hbm [shape: bf16[256,128], index: 5, kind: input, shape index: {}]
  %s6 = inlined_call_operand.vmem [shape: f32[1,128], index: 6, kind: input, shape index: {}]
  %s7 = inlined_call_operand.hbm [shape: f32[2,128], index: 7, kind: output, shape index: {}]
  %s8 = sld [smem:[#allocation0]]
  $region62: #{tpu_custom_call.1} parent=0
    _
  %s10 = ssub.s32 1, %s8
  %s11 = scalar_select 0, %s10, %s8
  $region1: #{tpu_custom_call.1} parent=0
    #allocation2 [shape = 'u8[65536]{0}', space=vmem, size = 0x10000, scoped, tag = 'input window, operand 0, single buffered']
    #allocation3 [shape = 's32[1]{0}', space=sflag, size = 0x4, scoped, tag = 'scoped memory for tpu_custom_call.1']
    #allocation4 [shape = 's32[1]{0}', space=sflag, size = 0x4, scoped, tag = 'scoped memory for tpu_custom_call.1']
    #allocation5 [shape = 'u8[8192]{0}', space=vmem, size = 0x2000, scoped, tag = 'input window, operand 1, single buffered']
    #allocation6 [shape = 's32[1]{0}', space=sflag, size = 0x4, scoped, tag = 'scoped memory for tpu_custom_call.1']
    #allocation7 [shape = 'u8[16384]{0}', space=vmem, size = 0x4000, scoped, tag = 'input window, operand 2, single buffered']
    #allocation8 [shape = 'u8[262144]{0}', space=vmem, size = 0x40000, scoped, tag = 'input window, operand 3, single buffered']
    #allocation9 [shape = 's32[1]{0}', space=sflag, size = 0x4, scoped, tag = 'scoped memory for tpu_custom_call.1']
    #allocation10 [shape = 'u8[32768]{0}', space=vmem, size = 0x8000, scoped, tag = 'input window, operand 4, single buffered']
    #allocation11 [shape = 'u8[65536]{0}', space=vmem, size = 0x10000, scoped, tag = 'input window, operand 5, single buffered']
    #allocation12 [shape = 's32[1]{0}', space=sflag, size = 0x4, scoped, tag = 'scoped memory for tpu_custom_call.1']
    #allocation13 [shape = 'u8[8192]{0}', space=vmem, size = 0x2000, scoped, tag = 'output window, operand 0, single buffered']
    %12 = vsyncpa [#allocation3], 0
    %13 = vsyncpa [#allocation6], 0
    %14 = vsyncpa [#allocation9], 0
    %15 = vsyncpa [#allocation12], 0
    %16 = vsyncpa [#allocation4], 0
    // Predicated region
    $region2: #{tpu_custom_call.1} parent=1 // pred_check
      _
    $region3: #{tpu_custom_call.1} parent=1 // pred_check_branch
      %18 = sbr.rel (0) target = $region5
    $region4: #{tpu_custom_call.1} parent=1 // pred_region
      %s20 = ssub.s32 2048, 256
      %21 = vsyncadd [#allocation3], %s20
      %s22 = sshll.u32 [#allocation2], 4
      %s23 = int_to_ptr.vmem [resolvable:$true] %s22
      %28 = dma.hbm_to_vmem [thread:$0]  %s0, 256, %s23, [#allocation3], 256, 256, 16
    $region5: #{tpu_custom_call.1} parent=1 // pred_fallthru
      _
    // Predicated region
    $region6: #{tpu_custom_call.1} parent=1 // pred_check
      _
    $region7: #{tpu_custom_call.1} parent=1 // pred_check_branch
      %30 = sbr.rel (0) target = $region9
    $region8: #{tpu_custom_call.1} parent=1 // pred_region
      %s32 = ssub.s32 256, 32
      %33 = vsyncadd [#allocation6], %s32
      %s34 = sshll.u32 [#allocation5], 4
      %s35 = int_to_ptr.vmem [resolvable:$true] %s34
      %40 = dma.hbm_to_vmem [thread:$0]  %s1, 32, %s35, [#allocation6], 32, 32, 2
    $region9: #{tpu_custom_call.1} parent=1 // pred_fallthru
      _
    // Predicated region
    $region10: #{tpu_custom_call.1} parent=1 // pred_check
      _
    $region11: #{tpu_custom_call.1} parent=1 // pred_check_branch
      %42 = sbr.rel (0) target = $region13
    $region12: #{tpu_custom_call.1} parent=1 // pred_region
      %s44 = ssub.s32 512, 64
      %45 = vsyncadd [#allocation6], %s44
      %s46 = sshll.u32 [#allocation7], 4
      %s47 = int_to_ptr.vmem [resolvable:$true] %s46
      %52 = dma.hbm_to_vmem [thread:$0]  %s2, 64, %s47, [#allocation6], 64, 64, 4
    $region13: #{tpu_custom_call.1} parent=1 // pred_fallthru
      _
    // Predicated region
    $region14: #{tpu_custom_call.1} parent=1 // pred_check
      _
    $region15: #{tpu_custom_call.1} parent=1 // pred_check_branch
      %54 = sbr.rel (0) target = $region17
    $region16: #{tpu_custom_call.1} parent=1 // pred_region
      %s56 = ssub.s32 8192, 8192
      %57 = vsyncadd [#allocation9], %s56
      %s58 = sshll.u32 [#allocation8], 4
      %s59 = int_to_ptr.vmem [resolvable:$true] %s58
      %64 = dma.hbm_to_vmem [thread:$0]  %s3, 8192, %s59, [#allocation9], 64, 64, 4
    $region17: #{tpu_custom_call.1} parent=1 // pred_fallthru
      _
    // Predicated region
    $region18: #{tpu_custom_call.1} parent=1 // pred_check
      _
    $region19: #{tpu_custom_call.1} parent=1 // pred_check_branch
      %66 = sbr.rel (0) target = $region21
    $region20: #{tpu_custom_call.1} parent=1 // pred_region
      %s68 = ssub.s32 1024, 1024
      %69 = vsyncadd [#allocation9], %s68
      %s70 = sshll.u32 [#allocation10], 4
      %s71 = int_to_ptr.vmem [resolvable:$true] %s70
      %76 = dma.hbm_to_vmem [thread:$0]  %s4, 1024, %s71, [#allocation9], 64, 64, 4
    $region21: #{tpu_custom_call.1} parent=1 // pred_fallthru
      _
    // Predicated region
    $region22: #{tpu_custom_call.1} parent=1 // pred_check
      _
    $region23: #{tpu_custom_call.1} parent=1 // pred_check_branch
      %78 = sbr.rel (0) target = $region25
    $region24: #{tpu_custom_call.1} parent=1 // pred_region
      %s80 = ssub.s32 2048, 2048
      %81 = vsyncadd [#allocation12], %s80
      %s82 = sshll.u32 [#allocation11], 4
      %s83 = int_to_ptr.vmem [resolvable:$true] %s82
      %88 = dma.hbm_to_vmem [thread:$0]  %s5, 2048, %s83, [#allocation12], 64, 64, 4
    $region25: #{tpu_custom_call.1} parent=1 // pred_fallthru
      _
    // Predicated region
    $region26: #{tpu_custom_call.1} parent=1 // pred_check
      _
    $region27: #{tpu_custom_call.1} parent=1 // pred_check_branch
      %90 = sbr.rel (0) target = $region29
    $region28: #{tpu_custom_call.1} parent=1 // pred_region
      _
    $region29: #{tpu_custom_call.1} parent=1 // pred_fallthru
      _
    // Predicated region
    $region30: #{tpu_custom_call.1} parent=1 // pred_check
      _
    $region31: #{tpu_custom_call.1} parent=1 // pred_check_branch
      %92 = sbr.rel (0) target = $region33
    $region32: #{tpu_custom_call.1} parent=1 // pred_region
      %93 = dma.done [#allocation3], 2048
    $region33: #{tpu_custom_call.1} parent=1 // pred_fallthru
      _
    // Predicated region
    $region34: #{tpu_custom_call.1} parent=1 // pred_check
      _
    $region35: #{tpu_custom_call.1} parent=1 // pred_check_branch
      %95 = sbr.rel (0) target = $region37
    $region36: #{tpu_custom_call.1} parent=1 // pred_region
      %96 = dma.done [#allocation6], 256
    $region37: #{tpu_custom_call.1} parent=1 // pred_fallthru
      _
    // Predicated region
    $region38: #{tpu_custom_call.1} parent=1 // pred_check
      _
    $region39: #{tpu_custom_call.1} parent=1 // pred_check_branch
      %98 = sbr.rel (0) target = $region41
    $region40: #{tpu_custom_call.1} parent=1 // pred_region
      %99 = dma.done [#allocation6], 512
    $region41: #{tpu_custom_call.1} parent=1 // pred_fallthru
      _
    // Predicated region
    $region42: #{tpu_custom_call.1} parent=1 // pred_check
      _
    $region43: #{tpu_custom_call.1} parent=1 // pred_check_branch
      %101 = sbr.rel (0) target = $region45
    $region44: #{tpu_custom_call.1} parent=1 // pred_region
      %102 = dma.done [#allocation9], 8192
    $region45: #{tpu_custom_call.1} parent=1 // pred_fallthru
      _
    // Predicated region
    $region46: #{tpu_custom_call.1} parent=1 // pred_check
      _
    $region47: #{tpu_custom_call.1} parent=1 // pred_check_branch
      %104 = sbr.rel (0) target = $region49
    $region48: #{tpu_custom_call.1} parent=1 // pred_region
      %105 = dma.done [#allocation9], 1024
    $region49: #{tpu_custom_call.1} parent=1 // pred_fallthru
      _
    // Predicated region
    $region50: #{tpu_custom_call.1} parent=1 // pred_check
      _
    $region51: #{tpu_custom_call.1} parent=1 // pred_check_branch
      %107 = sbr.rel (0) target = $region53
    $region52: #{tpu_custom_call.1} parent=1 // pred_region
      %108 = dma.done [#allocation12], 2048
    $region53: #{tpu_custom_call.1} parent=1 // pred_fallthru
      _
    %v110 = vld [vmem:[#allocation2] sm:$0xff]
    %v111 = vld [vmem:[#allocation2 + $0x8] sm:$0xff]
    %v112 = vld [vmem:[#allocation2 + $0x10] sm:$0xff]
    %v113 = vld [vmem:[#allocation2 + $0x18] sm:$0xff]
    %v114 = vld [vmem:[#allocation2 + $0x20] sm:$0xff]
    %v115 = vld [vmem:[#allocation2 + $0x28] sm:$0xff]
    %v116 = vld [vmem:[#allocation2 + $0x30] sm:$0xff]
    %v117 = vld [vmem:[#allocation2 + $0x38] sm:$0xff]
    %v118 = vld [vmem:[#allocation2 + $0x40] sm:$0xff]
    %v119 = vld [vmem:[#allocation2 + $0x48] sm:$0xff]
    %v120 = vld [vmem:[#allocation2 + $0x50] sm:$0xff]
    %v121 = vld [vmem:[#allocation2 + $0x58] sm:$0xff]
    %v122 = vld [vmem:[#allocation2 + $0x60] sm:$0xff]
    %v123 = vld [vmem:[#allocation2 + $0x68] sm:$0xff]
    %v124 = vld [vmem:[#allocation2 + $0x70] sm:$0xff]
    %v125 = vld [vmem:[#allocation2 + $0x78] sm:$0xff]
    %v142 = vcombine.low %v110, %v112
    %v143 = vcombine.high %v110, %v112
    %v144 = vcombine.low %v114, %v116
    %v145 = vcombine.high %v114, %v116
    %v147 = vunpack.c.l.s4 1983009808
    %v148 = vunpack.c.0.s8 %v147
    %v149 = vlaneseq
    %v150 = vshrl.u32 %v149, 7
    %v151 = vsub.s32 %v148, %v150
    %v152 = vrot.slane %v142, %v151
    %v154 = vunpack.c.l.s4 1983009808
    %v155 = vunpack.c.0.s8 %v154
    %v156 = vlaneseq
    %v157 = vshrl.u32 %v156, 7
    %v158 = vsub.s32 %v155, %v157
    %v159 = vrot.slane %v143, %v158
    %v161 = vunpack.c.l.s4 1983009808
    %v162 = vunpack.c.0.s8 %v161
    %v163 = vlaneseq
    %v164 = vshrl.u32 %v163, 7
    %v165 = vsub.s32 %v162, %v164
    %v166 = vrot.slane %v144, %v165
    %v168 = vunpack.c.l.s4 1983009808
    %v169 = vunpack.c.0.s8 %v168
    %v170 = vlaneseq
    %v171 = vshrl.u32 %v170, 7
    %v172 = vsub.s32 %v169, %v171
    %v173 = vrot.slane %v145, %v172
    %v174 = vcombine.low %v152, %v166
    %v175 = vcombine.high %v152, %v166
    %v176 = vcombine.low %v159, %v173
    %v177 = vcombine.high %v159, %v173
    %v178 = vcombine.low %v111, %v113
    %v179 = vcombine.high %v111, %v113
    %v180 = vcombine.low %v115, %v117
    %v181 = vcombine.high %v115, %v117
    %v183 = vunpack.c.l.s4 1983009808
    %v184 = vunpack.c.0.s8 %v183
    %v185 = vlaneseq
    %v186 = vshrl.u32 %v185, 7
    %v187 = vsub.s32 %v184, %v186
    %v188 = vrot.slane %v178, %v187
    %v190 = vunpack.c.l.s4 1983009808
    %v191 = vunpack.c.0.s8 %v190
    %v192 = vlaneseq
    %v193 = vshrl.u32 %v192, 7
    %v194 = vsub.s32 %v191, %v193
    %v195 = vrot.slane %v179, %v194
    %v197 = vunpack.c.l.s4 1983009808
    %v198 = vunpack.c.0.s8 %v197
    %v199 = vlaneseq
    %v200 = vshrl.u32 %v199, 7
    %v201 = vsub.s32 %v198, %v200
    %v202 = vrot.slane %v180, %v201
    %v204 = vunpack.c.l.s4 1983009808
    %v205 = vunpack.c.0.s8 %v204
    %v206 = vlaneseq
    %v207 = vshrl.u32 %v206, 7
    %v208 = vsub.s32 %v205, %v207
    %v209 = vrot.slane %v181, %v208
    %v210 = vcombine.low %v188, %v202
    %v211 = vcombine.high %v188, %v202
    %v212 = vcombine.low %v195, %v209
    %v213 = vcombine.high %v195, %v209
    %v214 = vcombine.low %v118, %v120
    %v215 = vcombine.high %v118, %v120
    %v216 = vcombine.low %v122, %v124
    %v217 = vcombine.high %v122, %v124
    %v219 = vunpack.c.l.s4 1983009808
    %v220 = vunpack.c.0.s8 %v219
    %v221 = vlaneseq
    %v222 = vshrl.u32 %v221, 7
    %v223 = vsub.s32 %v220, %v222
    %v224 = vrot.slane %v214, %v223
    %v226 = vunpack.c.l.s4 1983009808
    %v227 = vunpack.c.0.s8 %v226
    %v228 = vlaneseq
    %v229 = vshrl.u32 %v228, 7
    %v230 = vsub.s32 %v227, %v229
    %v231 = vrot.slane %v215, %v230
    %v233 = vunpack.c.l.s4 1983009808
    %v234 = vunpack.c.0.s8 %v233
    %v235 = vlaneseq
    %v236 = vshrl.u32 %v235, 7
    %v237 = vsub.s32 %v234, %v236
    %v238 = vrot.slane %v216, %v237
    %v240 = vunpack.c.l.s4 1983009808
    %v241 = vunpack.c.0.s8 %v240
    %v242 = vlaneseq
    %v243 = vshrl.u32 %v242, 7
    %v244 = vsub.s32 %v241, %v243
    %v245 = vrot.slane %v217, %v244
    %v246 = vcombine.low %v224, %v238
    %v247 = vcombine.high %v224, %v238
    %v248 = vcombine.low %v231, %v245
    %v249 = vcombine.high %v231, %v245
    %v250 = vcombine.low %v119, %v121
    %v251 = vcombine.high %v119, %v121
    %v252 = vcombine.low %v123, %v125
    %v253 = vcombine.high %v123, %v125
    %v255 = vunpack.c.l.s4 1983009808
    %v256 = vunpack.c.0.s8 %v255
    %v257 = vlaneseq
    %v258 = vshrl.u32 %v257, 7
    %v259 = vsub.s32 %v256, %v258
    %v260 = vrot.slane %v250, %v259
    %v262 = vunpack.c.l.s4 1983009808
    %v263 = vunpack.c.0.s8 %v262
    %v264 = vlaneseq
    %v265 = vshrl.u32 %v264, 7
    %v266 = vsub.s32 %v263, %v265
    %v267 = vrot.slane %v251, %v266
    %v269 = vunpack.c.l.s4 1983009808
    %v270 = vunpack.c.0.s8 %v269
    %v271 = vlaneseq
    %v272 = vshrl.u32 %v271, 7
    %v273 = vsub.s32 %v270, %v272
    %v274 = vrot.slane %v252, %v273
    %v276 = vunpack.c.l.s4 1983009808
    %v277 = vunpack.c.0.s8 %v276
    %v278 = vlaneseq
    %v279 = vshrl.u32 %v278, 7
    %v280 = vsub.s32 %v277, %v279
    %v281 = vrot.slane %v253, %v280
    %v282 = vcombine.low %v260, %v274
    %v283 = vcombine.high %v260, %v274
    %v284 = vcombine.low %v267, %v281
    %v285 = vcombine.high %v267, %v281
    %v302 = vpack.c.bf16 %v246, %v174
    %v303 = vpack.c.bf16 %v247, %v175
    %v304 = vpack.c.bf16 %v248, %v176
    %v305 = vpack.c.bf16 %v249, %v177
    %v306 = vpack.c.bf16 %v282, %v210
    %v307 = vpack.c.bf16 %v283, %v211
    %v308 = vpack.c.bf16 %v284, %v212
    %v309 = vpack.c.bf16 %v285, %v213
    %v310 = vld [vmem:[#allocation8] sm:$0xf]
    %v311 = vld [vmem:[#allocation8 + $0x4] sm:$0xf]
    %v312 = vld [vmem:[#allocation8 + $0x8] sm:$0xf]
    %v313 = vld [vmem:[#allocation8 + $0xc] sm:$0xf]
    %v314 = vld [vmem:[#allocation8 + $0x10] sm:$0xf]
    %v315 = vld [vmem:[#allocation8 + $0x14] sm:$0xf]
    %v316 = vld [vmem:[#allocation8 + $0x18] sm:$0xf]
    %v317 = vld [vmem:[#allocation8 + $0x1c] sm:$0xf]
    %v318 = vld [vmem:[#allocation8 + $0x20] sm:$0xf]
    %v319 = vld [vmem:[#allocation8 + $0x24] sm:$0xf]
    %v320 = vld [vmem:[#allocation8 + $0x28] sm:$0xf]
    %v321 = vld [vmem:[#allocation8 + $0x2c] sm:$0xf]
    %v322 = vld [vmem:[#allocation8 + $0x30] sm:$0xf]
    %v323 = vld [vmem:[#allocation8 + $0x34] sm:$0xf]
    %v324 = vld [vmem:[#allocation8 + $0x38] sm:$0xf]
    %v325 = vld [vmem:[#allocation8 + $0x3c] sm:$0xf]
    %v326 = vld [vmem:[#allocation8 + $0x40] sm:$0xf]
    %v327 = vld [vmem:[#allocation8 + $0x44] sm:$0xf]
    %v328 = vld [vmem:[#allocation8 + $0x48] sm:$0xf]
    %v329 = vld [vmem:[#allocation8 + $0x4c] sm:$0xf]
    %v330 = vld [vmem:[#allocation8 + $0x50] sm:$0xf]
    %v331 = vld [vmem:[#allocation8 + $0x54] sm:$0xf]
    %v332 = vld [vmem:[#allocation8 + $0x58] sm:$0xf]
    %v333 = vld [vmem:[#allocation8 + $0x5c] sm:$0xf]
    %v334 = vld [vmem:[#allocation8 + $0x60] sm:$0xf]
    %v335 = vld [vmem:[#allocation8 + $0x64] sm:$0xf]
    %v336 = vld [vmem:[#allocation8 + $0x68] sm:$0xf]
    %v337 = vld [vmem:[#allocation8 + $0x6c] sm:$0xf]
    %v338 = vld [vmem:[#allocation8 + $0x70] sm:$0xf]
    %v339 = vld [vmem:[#allocation8 + $0x74] sm:$0xf]
    %v340 = vld [vmem:[#allocation8 + $0x78] sm:$0xf]
    %v341 = vld [vmem:[#allocation8 + $0x7c] sm:$0xf]
    %v342 = vld [vmem:[#allocation8 + $0x80] sm:$0xf]
    %v343 = vld [vmem:[#allocation8 + $0x84] sm:$0xf]
    %v344 = vld [vmem:[#allocation8 + $0x88] sm:$0xf]
    %v345 = vld [vmem:[#allocation8 + $0x8c] sm:$0xf]
    %v346 = vld [vmem:[#allocation8 + $0x90] sm:$0xf]
    %v347 = vld [vmem:[#allocation8 + $0x94] sm:$0xf]
    %v348 = vld [vmem:[#allocation8 + $0x98] sm:$0xf]
    %v349 = vld [vmem:[#allocation8 + $0x9c] sm:$0xf]
    %v350 = vld [vmem:[#allocation8 + $0xa0] sm:$0xf]
    %v351 = vld [vmem:[#allocation8 + $0xa4] sm:$0xf]
    %v352 = vld [vmem:[#allocation8 + $0xa8] sm:$0xf]
    %v353 = vld [vmem:[#allocation8 + $0xac] sm:$0xf]
    %v354 = vld [vmem:[#allocation8 + $0xb0] sm:$0xf]
    %v355 = vld [vmem:[#allocation8 + $0xb4] sm:$0xf]
    %v356 = vld [vmem:[#allocation8 + $0xb8] sm:$0xf]
    %v357 = vld [vmem:[#allocation8 + $0xbc] sm:$0xf]
    %v358 = vld [vmem:[#allocation8 + $0xc0] sm:$0xf]
    %v359 = vld [vmem:[#allocation8 + $0xc4] sm:$0xf]
    %v360 = vld [vmem:[#allocation8 + $0xc8] sm:$0xf]
    %v361 = vld [vmem:[#allocation8 + $0xcc] sm:$0xf]
    %v362 = vld [vmem:[#allocation8 + $0xd0] sm:$0xf]
    %v363 = vld [vmem:[#allocation8 + $0xd4] sm:$0xf]
    %v364 = vld [vmem:[#allocation8 + $0xd8] sm:$0xf]
    %v365 = vld [vmem:[#allocation8 + $0xdc] sm:$0xf]
    %v366 = vld [vmem:[#allocation8 + $0xe0] sm:$0xf]
    %v367 = vld [vmem:[#allocation8 + $0xe4] sm:$0xf]
    %v368 = vld [vmem:[#allocation8 + $0xe8] sm:$0xf]
    %v369 = vld [vmem:[#allocation8 + $0xec] sm:$0xf]
    %v370 = vld [vmem:[#allocation8 + $0xf0] sm:$0xf]
    %v371 = vld [vmem:[#allocation8 + $0xf4] sm:$0xf]
    %v372 = vld [vmem:[#allocation8 + $0xf8] sm:$0xf]
    %v373 = vld [vmem:[#allocation8 + $0xfc] sm:$0xf]
    %v374 = vld [vmem:[#allocation8 + $0x100] sm:$0xf]
    %v375 = vld [vmem:[#allocation8 + $0x104] sm:$0xf]
    %v376 = vld [vmem:[#allocation8 + $0x108] sm:$0xf]
    %v377 = vld [vmem:[#allocation8 + $0x10c] sm:$0xf]
    %v378 = vld [vmem:[#allocation8 + $0x110] sm:$0xf]
    %v379 = vld [vmem:[#allocation8 + $0x114] sm:$0xf]
    %v380 = vld [vmem:[#allocation8 + $0x118] sm:$0xf]
    %v381 = vld [vmem:[#allocation8 + $0x11c] sm:$0xf]
    %v382 = vld [vmem:[#allocation8 + $0x120] sm:$0xf]
    %v383 = vld [vmem:[#allocation8 + $0x124] sm:$0xf]
    %v384 = vld [vmem:[#allocation8 + $0x128] sm:$0xf]
    %v385 = vld [vmem:[#allocation8 + $0x12c] sm:$0xf]
    %v386 = vld [vmem:[#allocation8 + $0x130] sm:$0xf]
    %v387 = vld [vmem:[#allocation8 + $0x134] sm:$0xf]
    %v388 = vld [vmem:[#allocation8 + $0x138] sm:$0xf]
    %v389 = vld [vmem:[#allocation8 + $0x13c] sm:$0xf]
    %v390 = vld [vmem:[#allocation8 + $0x140] sm:$0xf]
    %v391 = vld [vmem:[#allocation8 + $0x144] sm:$0xf]
    %v392 = vld [vmem:[#allocation8 + $0x148] sm:$0xf]
    %v393 = vld [vmem:[#allocation8 + $0x14c] sm:$0xf]
    %v394 = vld [vmem:[#allocation8 + $0x150] sm:$0xf]
    %v395 = vld [vmem:[#allocation8 + $0x154] sm:$0xf]
    %v396 = vld [vmem:[#allocation8 + $0x158] sm:$0xf]
    %v397 = vld [vmem:[#allocation8 + $0x15c] sm:$0xf]
    %v398 = vld [vmem:[#allocation8 + $0x160] sm:$0xf]
    %v399 = vld [vmem:[#allocation8 + $0x164] sm:$0xf]
    %v400 = vld [vmem:[#allocation8 + $0x168] sm:$0xf]
    %v401 = vld [vmem:[#allocation8 + $0x16c] sm:$0xf]
    %v402 = vld [vmem:[#allocation8 + $0x170] sm:$0xf]
    %v403 = vld [vmem:[#allocation8 + $0x174] sm:$0xf]
    %v404 = vld [vmem:[#allocation8 + $0x178] sm:$0xf]
    %v405 = vld [vmem:[#allocation8 + $0x17c] sm:$0xf]
    %v406 = vld [vmem:[#allocation8 + $0x180] sm:$0xf]
    %v407 = vld [vmem:[#allocation8 + $0x184] sm:$0xf]
    %v408 = vld [vmem:[#allocation8 + $0x188] sm:$0xf]
    %v409 = vld [vmem:[#allocation8 + $0x18c] sm:$0xf]
    %v410 = vld [vmem:[#allocation8 + $0x190] sm:$0xf]
    %v411 = vld [vmem:[#allocation8 + $0x194] sm:$0xf]
    %v412 = vld [vmem:[#allocation8 + $0x198] sm:$0xf]
    %v413 = vld [vmem:[#allocation8 + $0x19c] sm:$0xf]
    %v414 = vld [vmem:[#allocation8 + $0x1a0] sm:$0xf]
    %v415 = vld [vmem:[#allocation8 + $0x1a4] sm:$0xf]
    %v416 = vld [vmem:[#allocation8 + $0x1a8] sm:$0xf]
    %v417 = vld [vmem:[#allocation8 + $0x1ac] sm:$0xf]
    %v418 = vld [vmem:[#allocation8 + $0x1b0] sm:$0xf]
    %v419 = vld [vmem:[#allocation8 + $0x1b4] sm:$0xf]
    %v420 = vld [vmem:[#allocation8 + $0x1b8] sm:$0xf]
    %v421 = vld [vmem:[#allocation8 + $0x1bc] sm:$0xf]
    %v422 = vld [vmem:[#allocation8 + $0x1c0] sm:$0xf]
    %v423 = vld [vmem:[#allocation8 + $0x1c4] sm:$0xf]
    %v424 = vld [vmem:[#allocation8 + $0x1c8] sm:$0xf]
    %v425 = vld [vmem:[#allocation8 + $0x1cc] sm:$0xf]
    %v426 = vld [vmem:[#allocation8 + $0x1d0] sm:$0xf]
    %v427 = vld [vmem:[#allocation8 + $0x1d4] sm:$0xf]
    %v428 = vld [vmem:[#allocation8 + $0x1d8] sm:$0xf]
    %v429 = vld [vmem:[#allocation8 + $0x1dc] sm:$0xf]
    %v430 = vld [vmem:[#allocation8 + $0x1e0] sm:$0xf]
    %v431 = vld [vmem:[#allocation8 + $0x1e4] sm:$0xf]
    %v432 = vld [vmem:[#allocation8 + $0x1e8] sm:$0xf]
    %v433 = vld [vmem:[#allocation8 + $0x1ec] sm:$0xf]
    %v434 = vld [vmem:[#allocation8 + $0x1f0] sm:$0xf]
    %v435 = vld [vmem:[#allocation8 + $0x1f4] sm:$0xf]
    %v436 = vld [vmem:[#allocation8 + $0x1f8] sm:$0xf]
    %v437 = vld [vmem:[#allocation8 + $0x1fc] sm:$0xf]
    %v438 = vld [vmem:[#allocation5] sm:$0xff]
    %v439 = vld [vmem:[#allocation5 + $0x8] sm:$0xff]
    %v440 = vpack.c.bf16 %v439, %v438
    %v441 = vld [vmem:[#allocation10] sm:$0xf]
    %v442 = vld [vmem:[#allocation10 + $0x4] sm:$0xf]
    %v443 = vld [vmem:[#allocation10 + $0x8] sm:$0xf]
    %v444 = vld [vmem:[#allocation10 + $0xc] sm:$0xf]
    %v445 = vld [vmem:[#allocation10 + $0x10] sm:$0xf]
    %v446 = vld [vmem:[#allocation10 + $0x14] sm:$0xf]
    %v447 = vld [vmem:[#allocation10 + $0x18] sm:$0xf]
    %v448 = vld [vmem:[#allocation10 + $0x1c] sm:$0xf]
    %v449 = vld [vmem:[#allocation10 + $0x20] sm:$0xf]
    %v450 = vld [vmem:[#allocation10 + $0x24] sm:$0xf]
    %v451 = vld [vmem:[#allocation10 + $0x28] sm:$0xf]
    %v452 = vld [vmem:[#allocation10 + $0x2c] sm:$0xf]
    %v453 = vld [vmem:[#allocation10 + $0x30] sm:$0xf]
    %v454 = vld [vmem:[#allocation10 + $0x34] sm:$0xf]
    %v455 = vld [vmem:[#allocation10 + $0x38] sm:$0xf]
    %v456 = vld [vmem:[#allocation10 + $0x3c] sm:$0xf]
    %v473 = vunpack.c.l.b16 %v441
    %v474 = vunpack.c.l.b16 %v442
    %v475 = vunpack.c.l.b16 %v443
    %v476 = vunpack.c.l.b16 %v444
    %v477 = vunpack.c.l.b16 %v445
    %v478 = vunpack.c.l.b16 %v446
    %v479 = vunpack.c.l.b16 %v447
    %v480 = vunpack.c.l.b16 %v448
    %v481 = vunpack.c.l.b16 %v449
    %v482 = vunpack.c.l.b16 %v450
    %v483 = vunpack.c.l.b16 %v451
    %v484 = vunpack.c.l.b16 %v452
    %v485 = vunpack.c.l.b16 %v453
    %v486 = vunpack.c.l.b16 %v454
    %v487 = vunpack.c.l.b16 %v455
    %v488 = vunpack.c.l.b16 %v456
    %v489 = vpack.c.b16 %v474, %v473
    %v490 = vpack.c.b16 %v476, %v475
    %v491 = vpack.c.b16 %v478, %v477
    %v492 = vpack.c.b16 %v480, %v479
    %v493 = vpack.c.b16 %v482, %v481
    %v494 = vpack.c.b16 %v484, %v483
    %v495 = vpack.c.b16 %v486, %v485
    %v496 = vpack.c.b16 %v488, %v487
    %505 = vmatprep.subr.bf16.mxu0 0
    %506 = vmatpush1.bf16.msra.mxu0 %v496
    %507 = vmatprep.subr.bf16.mxu0 0
    %508 = vmatpush1.bf16.msra.mxu0 %v495
    %509 = vmatprep.subr.bf16.mxu0 0
    %510 = vmatpush1.bf16.msra.mxu0 %v494
    %511 = vmatprep.subr.bf16.mxu0 0
    %512 = vmatpush1.bf16.msra.mxu0 %v493
    %513 = vmatprep.subr.bf16.mxu0 0
    %514 = vmatpush1.bf16.msra.mxu0 %v492
    %515 = vmatprep.subr.bf16.mxu0 0
    %516 = vmatpush1.bf16.msra.mxu0 %v491
    %517 = vmatprep.subr.bf16.mxu0 0
    %518 = vmatpush1.bf16.msra.mxu0 %v490
    %519 = vmatprep.subr.bf16.mxu0 0
    %520 = vmatpush1.bf16.msra.mxu0 %v489
    %521 = vmatprep.subr.bf16.mxu0 0
    %522 = vmatpush2.bf16.msra.mxu0 0
    %523 = vmatprep.subr.bf16.mxu0 0
    %524 = vmatpush2.bf16.msra.mxu0 0
    %525 = vmatprep.subr.bf16.mxu0 0
    %526 = vmatpush2.bf16.msra.mxu0 0
    %527 = vmatprep.subr.bf16.mxu0 0
    %528 = vmatpush2.bf16.msra.mxu0 0
    %529 = vmatprep.subr.bf16.mxu0 0
    %530 = vmatpush2.bf16.msra.mxu0 0
    %531 = vmatprep.subr.bf16.mxu0 0
    %532 = vmatpush2.bf16.msra.mxu0 0
    %533 = vmatprep.subr.bf16.mxu0 0
    %534 = vmatpush2.bf16.msra.mxu0 0
    %535 = vmatprep.subr.bf16.mxu0 0
    %536 = vmatpush2.bf16.msra.mxu0 0
    %537 = vmatprep.mubr.bf16.mxu0 0
    %538 = vmatmul.mubr.bf16.gmra.mxu0 %v440
    %v539 = vpop.f32.mrf.mxu0
    %v540 = vadd.f32 0.0, %v539
    %v541 = vpop.f32.mrf.mxu0
    %v542 = vpop.f32.mrf.mxu0
    %v543 = vadd.f32 0.0, %v542
    %v544 = vpop.f32.mrf.mxu0
    %545 = vdwg.mxu0
    %v674 = vunpack.c.l.b16 %v310
    %v675 = vunpack.c.l.b16 %v311
    %v676 = vunpack.c.l.b16 %v312
    %v677 = vunpack.c.l.b16 %v313
    %v678 = vunpack.c.l.b16 %v314
    %v679 = vunpack.c.l.b16 %v315
    %v680 = vunpack.c.l.b16 %v316
    %v681 = vunpack.c.l.b16 %v317
    %v682 = vunpack.c.l.b16 %v318
    %v683 = vunpack.c.l.b16 %v319
    %v684 = vunpack.c.l.b16 %v320
    %v685 = vunpack.c.l.b16 %v321
    %v686 = vunpack.c.l.b16 %v322
    %v687 = vunpack.c.l.b16 %v323
    %v688 = vunpack.c.l.b16 %v324
    %v689 = vunpack.c.l.b16 %v325
    %v690 = vunpack.c.l.b16 %v326
    %v691 = vunpack.c.l.b16 %v327
    %v692 = vunpack.c.l.b16 %v328
    %v693 = vunpack.c.l.b16 %v329
    %v694 = vunpack.c.l.b16 %v330
    %v695 = vunpack.c.l.b16 %v331
    %v696 = vunpack.c.l.b16 %v332
    %v697 = vunpack.c.l.b16 %v333
    %v698 = vunpack.c.l.b16 %v334
    %v699 = vunpack.c.l.b16 %v335
    %v700 = vunpack.c.l.b16 %v336
    %v701 = vunpack.c.l.b16 %v337
    %v702 = vunpack.c.l.b16 %v338
    %v703 = vunpack.c.l.b16 %v339
    %v704 = vunpack.c.l.b16 %v340
    %v705 = vunpack.c.l.b16 %v341
    %v706 = vunpack.c.l.b16 %v342
    %v707 = vunpack.c.l.b16 %v343
    %v708 = vunpack.c.l.b16 %v344
    %v709 = vunpack.c.l.b16 %v345
    %v710 = vunpack.c.l.b16 %v346
    %v711 = vunpack.c.l.b16 %v347
    %v712 = vunpack.c.l.b16 %v348
    %v713 = vunpack.c.l.b16 %v349
    %v714 = vunpack.c.l.b16 %v350
    %v715 = vunpack.c.l.b16 %v351
    %v716 = vunpack.c.l.b16 %v352
    %v717 = vunpack.c.l.b16 %v353
    %v718 = vunpack.c.l.b16 %v354
    %v719 = vunpack.c.l.b16 %v355
    %v720 = vunpack.c.l.b16 %v356
    %v721 = vunpack.c.l.b16 %v357
    %v722 = vunpack.c.l.b16 %v358
    %v723 = vunpack.c.l.b16 %v359
    %v724 = vunpack.c.l.b16 %v360
    %v725 = vunpack.c.l.b16 %v361
    %v726 = vunpack.c.l.b16 %v362
    %v727 = vunpack.c.l.b16 %v363
    %v728 = vunpack.c.l.b16 %v364
    %v729 = vunpack.c.l.b16 %v365
    %v730 = vunpack.c.l.b16 %v366
    %v731 = vunpack.c.l.b16 %v367
    %v732 = vunpack.c.l.b16 %v368
    %v733 = vunpack.c.l.b16 %v369
    %v734 = vunpack.c.l.b16 %v370
    %v735 = vunpack.c.l.b16 %v371
    %v736 = vunpack.c.l.b16 %v372
    %v737 = vunpack.c.l.b16 %v373
    %v738 = vunpack.c.l.b16 %v374
    %v739 = vunpack.c.l.b16 %v375
    %v740 = vunpack.c.l.b16 %v376
    %v741 = vunpack.c.l.b16 %v377
    %v742 = vunpack.c.l.b16 %v378
    %v743 = vunpack.c.l.b16 %v379
    %v744 = vunpack.c.l.b16 %v380
    %v745 = vunpack.c.l.b16 %v381
    %v746 = vunpack.c.l.b16 %v382
    %v747 = vunpack.c.l.b16 %v383
    %v748 = vunpack.c.l.b16 %v384
    %v749 = vunpack.c.l.b16 %v385
    %v750 = vunpack.c.l.b16 %v386
    %v751 = vunpack.c.l.b16 %v387
    %v752 = vunpack.c.l.b16 %v388
    %v753 = vunpack.c.l.b16 %v389
    %v754 = vunpack.c.l.b16 %v390
    %v755 = vunpack.c.l.b16 %v391
    %v756 = vunpack.c.l.b16 %v392
    %v757 = vunpack.c.l.b16 %v393
    %v758 = vunpack.c.l.b16 %v394
    %v759 = vunpack.c.l.b16 %v395
    %v760 = vunpack.c.l.b16 %v396
    %v761 = vunpack.c.l.b16 %v397
    %v762 = vunpack.c.l.b16 %v398
    %v763 = vunpack.c.l.b16 %v399
    %v764 = vunpack.c.l.b16 %v400
    %v765 = vunpack.c.l.b16 %v401
    %v766 = vunpack.c.l.b16 %v402
    %v767 = vunpack.c.l.b16 %v403
    %v768 = vunpack.c.l.b16 %v404
    %v769 = vunpack.c.l.b16 %v405
    %v770 = vunpack.c.l.b16 %v406
    %v771 = vunpack.c.l.b16 %v407
    %v772 = vunpack.c.l.b16 %v408
    %v773 = vunpack.c.l.b16 %v409
    %v774 = vunpack.c.l.b16 %v410
    %v775 = vunpack.c.l.b16 %v411
    %v776 = vunpack.c.l.b16 %v412
    %v777 = vunpack.c.l.b16 %v413
    %v778 = vunpack.c.l.b16 %v414
    %v779 = vunpack.c.l.b16 %v415
    %v780 = vunpack.c.l.b16 %v416
    %v781 = vunpack.c.l.b16 %v417
    %v782 = vunpack.c.l.b16 %v418
    %v783 = vunpack.c.l.b16 %v419
    %v784 = vunpack.c.l.b16 %v420
    %v785 = vunpack.c.l.b16 %v421
    %v786 = vunpack.c.l.b16 %v422
    %v787 = vunpack.c.l.b16 %v423
    %v788 = vunpack.c.l.b16 %v424
    %v789 = vunpack.c.l.b16 %v425
    %v790 = vunpack.c.l.b16 %v426
    %v791 = vunpack.c.l.b16 %v427
    %v792 = vunpack.c.l.b16 %v428
    %v793 = vunpack.c.l.b16 %v429
    %v794 = vunpack.c.l.b16 %v430
    %v795 = vunpack.c.l.b16 %v431
    %v796 = vunpack.c.l.b16 %v432
    %v797 = vunpack.c.l.b16 %v433
    %v798 = vunpack.c.l.b16 %v434
    %v799 = vunpack.c.l.b16 %v435
    %v800 = vunpack.c.l.b16 %v436
    %v801 = vunpack.c.l.b16 %v437
    %v802 = vpack.c.b16 %v675, %v674
    %v803 = vpack.c.b16 %v677, %v676
    %v804 = vpack.c.b16 %v679, %v678
    %v805 = vpack.c.b16 %v681, %v680
    %v806 = vpack.c.b16 %v683, %v682
    %v807 = vpack.c.b16 %v685, %v684
    %v808 = vpack.c.b16 %v687, %v686
    %v809 = vpack.c.b16 %v689, %v688
    %v810 = vpack.c.b16 %v691, %v690
    %v811 = vpack.c.b16 %v693, %v692
    %v812 = vpack.c.b16 %v695, %v694
    %v813 = vpack.c.b16 %v697, %v696
    %v814 = vpack.c.b16 %v699, %v698
    %v815 = vpack.c.b16 %v701, %v700
    %v816 = vpack.c.b16 %v703, %v702
    %v817 = vpack.c.b16 %v705, %v704
    %v818 = vpack.c.b16 %v707, %v706
    %v819 = vpack.c.b16 %v709, %v708
    %v820 = vpack.c.b16 %v711, %v710
    %v821 = vpack.c.b16 %v713, %v712
    %v822 = vpack.c.b16 %v715, %v714
    %v823 = vpack.c.b16 %v717, %v716
    %v824 = vpack.c.b16 %v719, %v718
    %v825 = vpack.c.b16 %v721, %v720
    %v826 = vpack.c.b16 %v723, %v722
    %v827 = vpack.c.b16 %v725, %v724
    %v828 = vpack.c.b16 %v727, %v726
    %v829 = vpack.c.b16 %v729, %v728
    %v830 = vpack.c.b16 %v731, %v730
    %v831 = vpack.c.b16 %v733, %v732
    %v832 = vpack.c.b16 %v735, %v734
    %v833 = vpack.c.b16 %v737, %v736
    %v834 = vpack.c.b16 %v739, %v738
    %v835 = vpack.c.b16 %v741, %v740
    %v836 = vpack.c.b16 %v743, %v742
    %v837 = vpack.c.b16 %v745, %v744
    %v838 = vpack.c.b16 %v747, %v746
    %v839 = vpack.c.b16 %v749, %v748
    %v840 = vpack.c.b16 %v751, %v750
    %v841 = vpack.c.b16 %v753, %v752
    %v842 = vpack.c.b16 %v755, %v754
    %v843 = vpack.c.b16 %v757, %v756
    %v844 = vpack.c.b16 %v759, %v758
    %v845 = vpack.c.b16 %v761, %v760
    %v846 = vpack.c.b16 %v763, %v762
    %v847 = vpack.c.b16 %v765, %v764
    %v848 = vpack.c.b16 %v767, %v766
    %v849 = vpack.c.b16 %v769, %v768
    %v850 = vpack.c.b16 %v771, %v770
    %v851 = vpack.c.b16 %v773, %v772
    %v852 = vpack.c.b16 %v775, %v774
    %v853 = vpack.c.b16 %v777, %v776
    %v854 = vpack.c.b16 %v779, %v778
    %v855 = vpack.c.b16 %v781, %v780
    %v856 = vpack.c.b16 %v783, %v782
    %v857 = vpack.c.b16 %v785, %v784
    %v858 = vpack.c.b16 %v787, %v786
    %v859 = vpack.c.b16 %v789, %v788
    %v860 = vpack.c.b16 %v791, %v790
    %v861 = vpack.c.b16 %v793, %v792
    %v862 = vpack.c.b16 %v795, %v794
    %v863 = vpack.c.b16 %v797, %v796
    %v864 = vpack.c.b16 %v799, %v798
    %v865 = vpack.c.b16 %v801, %v800
    %930 = vmatprep.subr.bf16.mxu0 0
    %931 = vmatpush1.bf16.msra.mxu0 %v809
    %932 = vmatprep.subr.bf16.mxu0 0
    %933 = vmatpush1.bf16.msra.mxu0 %v808
    %934 = vmatprep.subr.bf16.mxu0 0
    %935 = vmatpush1.bf16.msra.mxu0 %v807
    %936 = vmatprep.subr.bf16.mxu0 0
    %937 = vmatpush1.bf16.msra.mxu0 %v806
    %938 = vmatprep.subr.bf16.mxu0 0
    %939 = vmatpush1.bf16.msra.mxu0 %v805
    %940 = vmatprep.subr.bf16.mxu0 0
    %941 = vmatpush1.bf16.msra.mxu0 %v804
    %942 = vmatprep.subr.bf16.mxu0 0
    %943 = vmatpush1.bf16.msra.mxu0 %v803
    %944 = vmatprep.subr.bf16.mxu0 0
    %945 = vmatpush1.bf16.msra.mxu0 %v802
    %946 = vmatprep.subr.bf16.mxu0 0
    %947 = vmatpush2.bf16.msra.mxu0 %v817
    %948 = vmatprep.subr.bf16.mxu0 0
    %949 = vmatpush2.bf16.msra.mxu0 %v816
    %950 = vmatprep.subr.bf16.mxu0 0
    %951 = vmatpush2.bf16.msra.mxu0 %v815
    %952 = vmatprep.subr.bf16.mxu0 0
    %953 = vmatpush2.bf16.msra.mxu0 %v814
    %954 = vmatprep.subr.bf16.mxu0 0
    %955 = vmatpush2.bf16.msra.mxu0 %v813
    %956 = vmatprep.subr.bf16.mxu0 0
    %957 = vmatpush2.bf16.msra.mxu0 %v812
    %958 = vmatprep.subr.bf16.mxu0 0
    %959 = vmatpush2.bf16.msra.mxu0 %v811
    %960 = vmatprep.subr.bf16.mxu0 0
    %961 = vmatpush2.bf16.msra.mxu0 %v810
    %962 = vmatprep.mubr.bf16.mxu0 %v303
    %963 = vmatmul.mubr.bf16.gmra.mxu0 %v302
    %v964 = vpop.f32.mrf.mxu0
    %v965 = vadd.f32 %v540, %v964
    %v966 = vpop.f32.mrf.mxu0
    %v967 = vpop.f32.mrf.mxu0
    %v968 = vadd.f32 %v543, %v967
    %v969 = vpop.f32.mrf.mxu0
    %970 = vdwg.mxu0
    %971 = vmatprep.subr.bf16.mxu0 0
    %972 = vmatpush1.bf16.msra.mxu0 %v825
    %973 = vmatprep.subr.bf16.mxu0 0
    %974 = vmatpush1.bf16.msra.mxu0 %v824
    %975 = vmatprep.subr.bf16.mxu0 0
    %976 = vmatpush1.bf16.msra.mxu0 %v823
    %977 = vmatprep.subr.bf16.mxu0 0
    %978 = vmatpush1.bf16.msra.mxu0 %v822
    %979 = vmatprep.subr.bf16.mxu0 0
    %980 = vmatpush1.bf16.msra.mxu0 %v821
    %981 = vmatprep.subr.bf16.mxu0 0
    %982 = vmatpush1.bf16.msra.mxu0 %v820
    %983 = vmatprep.subr.bf16.mxu0 0
    %984 = vmatpush1.bf16.msra.mxu0 %v819
    %985 = vmatprep.subr.bf16.mxu0 0
    %986 = vmatpush1.bf16.msra.mxu0 %v818
    %987 = vmatprep.subr.bf16.mxu0 0
    %988 = vmatpush2.bf16.msra.mxu0 %v833
    %989 = vmatprep.subr.bf16.mxu0 0
    %990 = vmatpush2.bf16.msra.mxu0 %v832
    %991 = vmatprep.subr.bf16.mxu0 0
    %992 = vmatpush2.bf16.msra.mxu0 %v831
    %993 = vmatprep.subr.bf16.mxu0 0
    %994 = vmatpush2.bf16.msra.mxu0 %v830
    %995 = vmatprep.subr.bf16.mxu0 0
    %996 = vmatpush2.bf16.msra.mxu0 %v829
    %997 = vmatprep.subr.bf16.mxu0 0
    %998 = vmatpush2.bf16.msra.mxu0 %v828
    %999 = vmatprep.subr.bf16.mxu0 0
    %1000 = vmatpush2.bf16.msra.mxu0 %v827
    %1001 = vmatprep.subr.bf16.mxu0 0
    %1002 = vmatpush2.bf16.msra.mxu0 %v826
    %1003 = vmatprep.mubr.bf16.mxu0 %v305
    %1004 = vmatmul.mubr.bf16.gmra.mxu0 %v304
    %v1005 = vpop.f32.mrf.mxu0
    %v1006 = vadd.f32 %v965, %v1005
    %v1007 = vpop.f32.mrf.mxu0
    %v1008 = vpop.f32.mrf.mxu0
    %v1009 = vadd.f32 %v968, %v1008
    %v1010 = vpop.f32.mrf.mxu0
    %1011 = vdwg.mxu0
    %1012 = vmatprep.subr.bf16.mxu0 0
    %1013 = vmatpush1.bf16.msra.mxu0 %v841
    %1014 = vmatprep.subr.bf16.mxu0 0
    %1015 = vmatpush1.bf16.msra.mxu0 %v840
    %1016 = vmatprep.subr.bf16.mxu0 0
    %1017 = vmatpush1.bf16.msra.mxu0 %v839
    %1018 = vmatprep.subr.bf16.mxu0 0
    %1019 = vmatpush1.bf16.msra.mxu0 %v838
    %1020 = vmatprep.subr.bf16.mxu0 0
    %1021 = vmatpush1.bf16.msra.mxu0 %v837
    %1022 = vmatprep.subr.bf16.mxu0 0
    %1023 = vmatpush1.bf16.msra.mxu0 %v836
    %1024 = vmatprep.subr.bf16.mxu0 0
    %1025 = vmatpush1.bf16.msra.mxu0 %v835
    %1026 = vmatprep.subr.bf16.mxu0 0
    %1027 = vmatpush1.bf16.msra.mxu0 %v834
    %1028 = vmatprep.subr.bf16.mxu0 0
    %1029 = vmatpush2.bf16.msra.mxu0 %v849
    %1030 = vmatprep.subr.bf16.mxu0 0
    %1031 = vmatpush2.bf16.msra.mxu0 %v848
    %1032 = vmatprep.subr.bf16.mxu0 0
    %1033 = vmatpush2.bf16.msra.mxu0 %v847
    %1034 = vmatprep.subr.bf16.mxu0 0
    %1035 = vmatpush2.bf16.msra.mxu0 %v846
    %1036 = vmatprep.subr.bf16.mxu0 0
    %1037 = vmatpush2.bf16.msra.mxu0 %v845
    %1038 = vmatprep.subr.bf16.mxu0 0
    %1039 = vmatpush2.bf16.msra.mxu0 %v844
    %1040 = vmatprep.subr.bf16.mxu0 0
    %1041 = vmatpush2.bf16.msra.mxu0 %v843
    %1042 = vmatprep.subr.bf16.mxu0 0
    %1043 = vmatpush2.bf16.msra.mxu0 %v842
    %1044 = vmatprep.mubr.bf16.mxu0 %v307
    %1045 = vmatmul.mubr.bf16.gmra.mxu0 %v306
    %v1046 = vpop.f32.mrf.mxu0
    %v1047 = vadd.f32 %v1006, %v1046
    %v1048 = vpop.f32.mrf.mxu0
    %v1049 = vpop.f32.mrf.mxu0
    %v1050 = vadd.f32 %v1009, %v1049
    %v1051 = vpop.f32.mrf.mxu0
    %1052 = vdwg.mxu0
    %1053 = vmatprep.subr.bf16.mxu0 0
    %1054 = vmatpush1.bf16.msra.mxu0 %v857
    %1055 = vmatprep.subr.bf16.mxu0 0
    %1056 = vmatpush1.bf16.msra.mxu0 %v856
    %1057 = vmatprep.subr.bf16.mxu0 0
    %1058 = vmatpush1.bf16.msra.mxu0 %v855
    %1059 = vmatprep.subr.bf16.mxu0 0
    %1060 = vmatpush1.bf16.msra.mxu0 %v854
    %1061 = vmatprep.subr.bf16.mxu0 0
    %1062 = vmatpush1.bf16.msra.mxu0 %v853
    %1063 = vmatprep.subr.bf16.mxu0 0
    %1064 = vmatpush1.bf16.msra.mxu0 %v852
    %1065 = vmatprep.subr.bf16.mxu0 0
    %1066 = vmatpush1.bf16.msra.mxu0 %v851
    %1067 = vmatprep.subr.bf16.mxu0 0
    %1068 = vmatpush1.bf16.msra.mxu0 %v850
    %1069 = vmatprep.subr.bf16.mxu0 0
    %1070 = vmatpush2.bf16.msra.mxu0 %v865
    %1071 = vmatprep.subr.bf16.mxu0 0
    %1072 = vmatpush2.bf16.msra.mxu0 %v864
    %1073 = vmatprep.subr.bf16.mxu0 0
    %1074 = vmatpush2.bf16.msra.mxu0 %v863
    %1075 = vmatprep.subr.bf16.mxu0 0
    %1076 = vmatpush2.bf16.msra.mxu0 %v862
    %1077 = vmatprep.subr.bf16.mxu0 0
    %1078 = vmatpush2.bf16.msra.mxu0 %v861
    %1079 = vmatprep.subr.bf16.mxu0 0
    %1080 = vmatpush2.bf16.msra.mxu0 %v860
    %1081 = vmatprep.subr.bf16.mxu0 0
    %1082 = vmatpush2.bf16.msra.mxu0 %v859
    %1083 = vmatprep.subr.bf16.mxu0 0
    %1084 = vmatpush2.bf16.msra.mxu0 %v858
    %1085 = vmatprep.mubr.bf16.mxu0 %v309
    %1086 = vmatmul.mubr.bf16.gmra.mxu0 %v308
    %v1087 = vpop.f32.mrf.mxu0
    %v1088 = vadd.f32 %v1047, %v1087
    %v1089 = vpop.f32.mrf.mxu0
    %v1090 = vpop.f32.mrf.mxu0
    %v1091 = vadd.f32 %v1050, %v1090
    %v1092 = vpop.f32.mrf.mxu0
    %1093 = vdwg.mxu0
    %v1094 = vld [vmem:[#allocation7] sm:$0xf]
    %v1095 = vld [vmem:[#allocation7 + $0x4] sm:$0xf]
    %v1096 = vld [vmem:[#allocation7 + $0x8] sm:$0xf]
    %v1097 = vld [vmem:[#allocation7 + $0xc] sm:$0xf]
    %v1098 = vld [vmem:[#allocation7 + $0x10] sm:$0xf]
    %v1099 = vld [vmem:[#allocation7 + $0x14] sm:$0xf]
    %v1100 = vld [vmem:[#allocation7 + $0x18] sm:$0xf]
    %v1101 = vld [vmem:[#allocation7 + $0x1c] sm:$0xf]
    %v1110 = vcombine.low %v1094, %v1095
    %v1111 = vcombine.low %v1096, %v1097
    %v1113 = vunpack.c.l.s4 1983009808
    %v1114 = vunpack.c.0.s8 %v1113
    %v1115 = vlaneseq
    %v1116 = vshrl.u32 %v1115, 7
    %v1117 = vsub.s32 %v1114, %v1116
    %v1118 = vrot.slane %v1110, %v1117
    %v1120 = vunpack.c.l.s4 1983009808
    %v1121 = vunpack.c.0.s8 %v1120
    %v1122 = vlaneseq
    %v1123 = vshrl.u32 %v1122, 7
    %v1124 = vsub.s32 %v1121, %v1123
    %v1125 = vrot.slane %v1111, %v1124
    %v1126 = vcombine.low %v1118, %v1125
    %v1127 = vcombine.high %v1118, %v1125
    %v1128 = vcombine.low %v1098, %v1099
    %v1129 = vcombine.low %v1100, %v1101
    %v1131 = vunpack.c.l.s4 1983009808
    %v1132 = vunpack.c.0.s8 %v1131
    %v1133 = vlaneseq
    %v1134 = vshrl.u32 %v1133, 7
    %v1135 = vsub.s32 %v1132, %v1134
    %v1136 = vrot.slane %v1128, %v1135
    %v1138 = vunpack.c.l.s4 1983009808
    %v1139 = vunpack.c.0.s8 %v1138
    %v1140 = vlaneseq
    %v1141 = vshrl.u32 %v1140, 7
    %v1142 = vsub.s32 %v1139, %v1141
    %v1143 = vrot.slane %v1129, %v1142
    %v1144 = vcombine.low %v1136, %v1143
    %v1145 = vcombine.high %v1136, %v1143
    %v1150 = vpack.c.bf16 %v1144, %v1126
    %v1151 = vpack.c.bf16 %v1145, %v1127
    %v1152 = vld [vmem:[#allocation11] sm:$0xf]
    %v1153 = vld [vmem:[#allocation11 + $0x4] sm:$0xf]
    %v1154 = vld [vmem:[#allocation11 + $0x8] sm:$0xf]
    %v1155 = vld [vmem:[#allocation11 + $0xc] sm:$0xf]
    %v1156 = vld [vmem:[#allocation11 + $0x10] sm:$0xf]
    %v1157 = vld [vmem:[#allocation11 + $0x14] sm:$0xf]
    %v1158 = vld [vmem:[#allocation11 + $0x18] sm:$0xf]
    %v1159 = vld [vmem:[#allocation11 + $0x1c] sm:$0xf]
    %v1160 = vld [vmem:[#allocation11 + $0x20] sm:$0xf]
    %v1161 = vld [vmem:[#allocation11 + $0x24] sm:$0xf]
    %v1162 = vld [vmem:[#allocation11 + $0x28] sm:$0xf]
    %v1163 = vld [vmem:[#allocation11 + $0x2c] sm:$0xf]
    %v1164 = vld [vmem:[#allocation11 + $0x30] sm:$0xf]
    %v1165 = vld [vmem:[#allocation11 + $0x34] sm:$0xf]
    %v1166 = vld [vmem:[#allocation11 + $0x38] sm:$0xf]
    %v1167 = vld [vmem:[#allocation11 + $0x3c] sm:$0xf]
    %v1168 = vld [vmem:[#allocation11 + $0x40] sm:$0xf]
    %v1169 = vld [vmem:[#allocation11 + $0x44] sm:$0xf]
    %v1170 = vld [vmem:[#allocation11 + $0x48] sm:$0xf]
    %v1171 = vld [vmem:[#allocation11 + $0x4c] sm:$0xf]
    %v1172 = vld [vmem:[#allocation11 + $0x50] sm:$0xf]
    %v1173 = vld [vmem:[#allocation11 + $0x54] sm:$0xf]
    %v1174 = vld [vmem:[#allocation11 + $0x58] sm:$0xf]
    %v1175 = vld [vmem:[#allocation11 + $0x5c] sm:$0xf]
    %v1176 = vld [vmem:[#allocation11 + $0x60] sm:$0xf]
    %v1177 = vld [vmem:[#allocation11 + $0x64] sm:$0xf]
    %v1178 = vld [vmem:[#allocation11 + $0x68] sm:$0xf]
    %v1179 = vld [vmem:[#allocation11 + $0x6c] sm:$0xf]
    %v1180 = vld [vmem:[#allocation11 + $0x70] sm:$0xf]
    %v1181 = vld [vmem:[#allocation11 + $0x74] sm:$0xf]
    %v1182 = vld [vmem:[#allocation11 + $0x78] sm:$0xf]
    %v1183 = vld [vmem:[#allocation11 + $0x7c] sm:$0xf]
    %v1216 = vunpack.c.l.b16 %v1152
    %v1217 = vunpack.c.l.b16 %v1153
    %v1218 = vunpack.c.l.b16 %v1154
    %v1219 = vunpack.c.l.b16 %v1155
    %v1220 = vunpack.c.l.b16 %v1156
    %v1221 = vunpack.c.l.b16 %v1157
    %v1222 = vunpack.c.l.b16 %v1158
    %v1223 = vunpack.c.l.b16 %v1159
    %v1224 = vunpack.c.l.b16 %v1160
    %v1225 = vunpack.c.l.b16 %v1161
    %v1226 = vunpack.c.l.b16 %v1162
    %v1227 = vunpack.c.l.b16 %v1163
    %v1228 = vunpack.c.l.b16 %v1164
    %v1229 = vunpack.c.l.b16 %v1165
    %v1230 = vunpack.c.l.b16 %v1166
    %v1231 = vunpack.c.l.b16 %v1167
    %v1232 = vunpack.c.l.b16 %v1168
    %v1233 = vunpack.c.l.b16 %v1169
    %v1234 = vunpack.c.l.b16 %v1170
    %v1235 = vunpack.c.l.b16 %v1171
    %v1236 = vunpack.c.l.b16 %v1172
    %v1237 = vunpack.c.l.b16 %v1173
    %v1238 = vunpack.c.l.b16 %v1174
    %v1239 = vunpack.c.l.b16 %v1175
    %v1240 = vunpack.c.l.b16 %v1176
    %v1241 = vunpack.c.l.b16 %v1177
    %v1242 = vunpack.c.l.b16 %v1178
    %v1243 = vunpack.c.l.b16 %v1179
    %v1244 = vunpack.c.l.b16 %v1180
    %v1245 = vunpack.c.l.b16 %v1181
    %v1246 = vunpack.c.l.b16 %v1182
    %v1247 = vunpack.c.l.b16 %v1183
    %v1248 = vpack.c.b16 %v1217, %v1216
    %v1249 = vpack.c.b16 %v1219, %v1218
    %v1250 = vpack.c.b16 %v1221, %v1220
    %v1251 = vpack.c.b16 %v1223, %v1222
    %v1252 = vpack.c.b16 %v1225, %v1224
    %v1253 = vpack.c.b16 %v1227, %v1226
    %v1254 = vpack.c.b16 %v1229, %v1228
    %v1255 = vpack.c.b16 %v1231, %v1230
    %v1256 = vpack.c.b16 %v1233, %v1232
    %v1257 = vpack.c.b16 %v1235, %v1234
    %v1258 = vpack.c.b16 %v1237, %v1236
    %v1259 = vpack.c.b16 %v1239, %v1238
    %v1260 = vpack.c.b16 %v1241, %v1240
    %v1261 = vpack.c.b16 %v1243, %v1242
    %v1262 = vpack.c.b16 %v1245, %v1244
    %v1263 = vpack.c.b16 %v1247, %v1246
    %1280 = vmatprep.subr.bf16.mxu0 0
    %1281 = vmatpush1.bf16.msra.mxu0 %v1255
    %1282 = vmatprep.subr.bf16.mxu0 0
    %1283 = vmatpush1.bf16.msra.mxu0 %v1254
    %1284 = vmatprep.subr.bf16.mxu0 0
    %1285 = vmatpush1.bf16.msra.mxu0 %v1253
    %1286 = vmatprep.subr.bf16.mxu0 0
    %1287 = vmatpush1.bf16.msra.mxu0 %v1252
    %1288 = vmatprep.subr.bf16.mxu0 0
    %1289 = vmatpush1.bf16.msra.mxu0 %v1251
    %1290 = vmatprep.subr.bf16.mxu0 0
    %1291 = vmatpush1.bf16.msra.mxu0 %v1250
    %1292 = vmatprep.subr.bf16.mxu0 0
    %1293 = vmatpush1.bf16.msra.mxu0 %v1249
    %1294 = vmatprep.subr.bf16.mxu0 0
    %1295 = vmatpush1.bf16.msra.mxu0 %v1248
    %1296 = vmatprep.subr.bf16.mxu0 0
    %1297 = vmatpush2.bf16.msra.mxu0 %v1263
    %1298 = vmatprep.subr.bf16.mxu0 0
    %1299 = vmatpush2.bf16.msra.mxu0 %v1262
    %1300 = vmatprep.subr.bf16.mxu0 0
    %1301 = vmatpush2.bf16.msra.mxu0 %v1261
    %1302 = vmatprep.subr.bf16.mxu0 0
    %1303 = vmatpush2.bf16.msra.mxu0 %v1260
    %1304 = vmatprep.subr.bf16.mxu0 0
    %1305 = vmatpush2.bf16.msra.mxu0 %v1259
    %1306 = vmatprep.subr.bf16.mxu0 0
    %1307 = vmatpush2.bf16.msra.mxu0 %v1258
    %1308 = vmatprep.subr.bf16.mxu0 0
    %1309 = vmatpush2.bf16.msra.mxu0 %v1257
    %1310 = vmatprep.subr.bf16.mxu0 0
    %1311 = vmatpush2.bf16.msra.mxu0 %v1256
    %1312 = vmatprep.mubr.bf16.mxu0 %v1151
    %1313 = vmatmul.mubr.bf16.gmra.mxu0 %v1150
    %v1314 = vpop.f32.mrf.mxu0
    %v1315 = vadd.f32 0.0, %v1314
    %v1316 = vpop.f32.mrf.mxu0
    %v1317 = vpop.f32.mrf.mxu0
    %v1318 = vadd.f32 0.0, %v1317
    %v1319 = vpop.f32.mrf.mxu0
    %1320 = vdwg.mxu0
    %v1321 = vadd.f32 %v1088, %v1315
    %v1322 = vadd.f32 %v1091, %v1318
    %v1323 = vld [vmem:[%s6] sm:$0x1]
    %v1325 = vlaneseq
    %v1326 = vshrl.u32 %v1325, 7
    %v1327 = vsub.s32 0, %v1326
    %v1328 = vrot.slane %v1323, %v1327
    %v1330 = vadd.f32 %v1321, %v1328
    %v1331 = vadd.f32 %v1322, %v1328
    %1332 = vst [vmem:[#allocation13] sm:$0xff] %v1330
    %1333 = vst [vmem:[#allocation13 + $0x8] sm:$0xff] %v1331
    // Predicated region
    $region54: #{tpu_custom_call.1} parent=1 // pred_check
      _
    $region55: #{tpu_custom_call.1} parent=1 // pred_check_branch
      %1335 = sbr.rel (0) target = $region57
    $region56: #{tpu_custom_call.1} parent=1 // pred_region
      %s1337 = ssub.s32 256, 32
      %1338 = vsyncadd [#allocation4], %s1337
      %s1339 = sshll.u32 [#allocation13], 4
      %s1340 = int_to_ptr.vmem [resolvable:$true] %s1339
      %1345 = dma.vmem_to_hbm [thread:$0]  %s1340, 32, %s7, [#allocation4], 32, 32, 2
    $region57: #{tpu_custom_call.1} parent=1 // pred_fallthru
      _
    // Predicated region
    $region58: #{tpu_custom_call.1} parent=1 // pred_check
      _
    $region59: #{tpu_custom_call.1} parent=1 // pred_check_branch
      %1347 = sbr.rel (0) target = $region61
    $region60: #{tpu_custom_call.1} parent=1 // pred_region
      %1348 = dma.done [#allocation4], 256
    $region61: #{tpu_custom_call.1} parent=1 // pred_fallthru
      _
    %1349 = vsyncpa [#allocation3], 1
    %1350 = vsyncpa [#allocation6], 1
    %1351 = vsyncpa [#allocation9], 1
    %1352 = vsyncpa [#allocation12], 1
    %1353 = vsyncpa [#allocation4], 1

// kernel: tpu_custom_call.1
$region0: #{tpu_custom_call.1}
  #allocation0 [shape = 'u32[]', space=smem, size = 0x4, offset = 0x4, fixed_abs, tag = 'smem constant byte address 0x4 - core index']
  #allocation1 [shape = 'u32[144,128]{1,0:T(1,128)}', space=vmem, size = 0x12000, scoped, tag = 'internal scratch']
  %s0 = inlined_call_operand.hbm [shape: f32[2,1024], index: 0, kind: input, shape index: {}]
  %s1 = inlined_call_operand.hbm [shape: f32[2,128], index: 1, kind: input, shape index: {}]
  %s2 = inlined_call_operand.hbm [shape: f32[2,256], index: 2, kind: input, shape index: {}]
  %s3 = inlined_call_operand.hbm [shape: bf16[1024,128], index: 3, kind: input, shape index: {}]
  %s4 = inlined_call_operand.hbm [shape: bf16[128,128], index: 4, kind: input, shape index: {}]
  %s5 = inlined_call_operand.hbm [shape: bf16[256,128], index: 5, kind: input, shape index: {}]
  %s6 = inlined_call_operand.vmem [shape: f32[1,128], index: 6, kind: input, shape index: {}]
  %s7 = inlined_call_operand.hbm [shape: f32[2,128], index: 7, kind: output, shape index: {}]
  %s8 = sld [smem:[#allocation0]]
  $region62: #{tpu_custom_call.1} parent=0
    _
  %s10 = ssub.s32 1, %s8
  %s11 = scalar_select 0, %s10, %s8
  $region1: #{tpu_custom_call.1} parent=0
    #allocation2 [shape = 'u8[65536]{0}', space=vmem, size = 0x10000, scoped, tag = 'input window, operand 0, single buffered']
    #allocation3 [shape = 's32[1]{0}', space=sflag, size = 0x4, scoped, tag = 'scoped memory for tpu_custom_call.1']
    #allocation4 [shape = 's32[1]{0}', space=sflag, size = 0x4, scoped, tag = 'scoped memory for tpu_custom_call.1']
    #allocation5 [shape = 'u8[8192]{0}', space=vmem, size = 0x2000, scoped, tag = 'input window, operand 1, single buffered']
    #allocation6 [shape = 's32[1]{0}', space=sflag, size = 0x4, scoped, tag = 'scoped memory for tpu_custom_call.1']
    #allocation7 [shape = 'u8[16384]{0}', space=vmem, size = 0x4000, scoped, tag = 'input window, operand 2, single buffered']
    #allocation8 [shape = 'u8[262144]{0}', space=vmem, size = 0x40000, scoped, tag = 'input window, operand 3, single buffered']
    #allocation9 [shape = 's32[1]{0}', space=sflag, size = 0x4, scoped, tag = 'scoped memory for tpu_custom_call.1']
    #allocation10 [shape = 'u8[32768]{0}', space=vmem, size = 0x8000, scoped, tag = 'input window, operand 4, single buffered']
    #allocation11 [shape = 'u8[65536]{0}', space=vmem, size = 0x10000, scoped, tag = 'input window, operand 5, single buffered']
    #allocation12 [shape = 's32[1]{0}', space=sflag, size = 0x4, scoped, tag = 'scoped memory for tpu_custom_call.1']
    #allocation13 [shape = 'u8[8192]{0}', space=vmem, size = 0x2000, scoped, tag = 'output window, operand 0, single buffered']
    %12 = vsyncpa [#allocation3], 0
    %13 = vsyncpa [#allocation6], 0
    %14 = vsyncpa [#allocation9], 0
    %15 = vsyncpa [#allocation12], 0
    %16 = vsyncpa [#allocation4], 0
    // Predicated region
    $region2: #{tpu_custom_call.1} parent=1 // pred_check
      _
    $region3: #{tpu_custom_call.1} parent=1 // pred_check_branch
      %18 = sbr.rel (0) target = $region5
    $region4: #{tpu_custom_call.1} parent=1 // pred_region
      %s20 = ssub.s32 2048, 256
      %21 = vsyncadd [#allocation3], %s20
      %s22 = sshll.u32 [#allocation2], 4
      %s23 = int_to_ptr.vmem [resolvable:$true] %s22
      %28 = dma.hbm_to_vmem [thread:$0]  %s0, 256, %s23, [#allocation3], 256, 256, 16
    $region5: #{tpu_custom_call.1} parent=1 // pred_fallthru
      _
    // Predicated region
    $region6: #{tpu_custom_call.1} parent=1 // pred_check
      _
    $region7: #{tpu_custom_call.1} parent=1 // pred_check_branch
      %30 = sbr.rel (0) target = $region9
    $region8: #{tpu_custom_call.1} parent=1 // pred_region
      %s32 = ssub.s32 256, 32
      %33 = vsyncadd [#allocation6], %s32
      %s34 = sshll.u32 [#allocation5], 4
      %s35 = int_to_ptr.vmem [resolvable:$true] %s34
      %40 = dma.hbm_to_vmem [thread:$0]  %s1, 32, %s35, [#allocation6], 32, 32, 2
    $region9: #{tpu_custom_call.1} parent=1 // pred_fallthru
      _
    // Predicated region
    $region10: #{tpu_custom_call.1} parent=1 // pred_check
      _
    $region11: #{tpu_custom_call.1} parent=1 // pred_check_branch
      %42 = sbr.rel (0) target = $region13
    $region12: #{tpu_custom_call.1} parent=1 // pred_region
      %s44 = ssub.s32 512, 64
      %45 = vsyncadd [#allocation6], %s44
      %s46 = sshll.u32 [#allocation7], 4
      %s47 = int_to_ptr.vmem [resolvable:$true] %s46
      %52 = dma.hbm_to_vmem [thread:$0]  %s2, 64, %s47, [#allocation6], 64, 64, 4
    $region13: #{tpu_custom_call.1} parent=1 // pred_fallthru
      _
    // Predicated region
    $region14: #{tpu_custom_call.1} parent=1 // pred_check
      _
    $region15: #{tpu_custom_call.1} parent=1 // pred_check_branch
      %54 = sbr.rel (0) target = $region17
    $region16: #{tpu_custom_call.1} parent=1 // pred_region
      %s56 = ssub.s32 8192, 8192
      %57 = vsyncadd [#allocation9], %s56
      %s58 = sshll.u32 [#allocation8], 4
      %s59 = int_to_ptr.vmem [resolvable:$true] %s58
      %64 = dma.hbm_to_vmem [thread:$0]  %s3, 8192, %s59, [#allocation9], 64, 64, 4
    $region17: #{tpu_custom_call.1} parent=1 // pred_fallthru
      _
    // Predicated region
    $region18: #{tpu_custom_call.1} parent=1 // pred_check
      _
    $region19: #{tpu_custom_call.1} parent=1 // pred_check_branch
      %66 = sbr.rel (0) target = $region21
    $region20: #{tpu_custom_call.1} parent=1 // pred_region
      %s68 = ssub.s32 1024, 1024
      %69 = vsyncadd [#allocation9], %s68
      %s70 = sshll.u32 [#allocation10], 4
      %s71 = int_to_ptr.vmem [resolvable:$true] %s70
      %76 = dma.hbm_to_vmem [thread:$0]  %s4, 1024, %s71, [#allocation9], 64, 64, 4
    $region21: #{tpu_custom_call.1} parent=1 // pred_fallthru
      _
    // Predicated region
    $region22: #{tpu_custom_call.1} parent=1 // pred_check
      _
    $region23: #{tpu_custom_call.1} parent=1 // pred_check_branch
      %78 = sbr.rel (0) target = $region25
    $region24: #{tpu_custom_call.1} parent=1 // pred_region
      %s80 = ssub.s32 2048, 2048
      %81 = vsyncadd [#allocation12], %s80
      %s82 = sshll.u32 [#allocation11], 4
      %s83 = int_to_ptr.vmem [resolvable:$true] %s82
      %88 = dma.hbm_to_vmem [thread:$0]  %s5, 2048, %s83, [#allocation12], 64, 64, 4
    $region25: #{tpu_custom_call.1} parent=1 // pred_fallthru
      _
    // Predicated region
    $region26: #{tpu_custom_call.1} parent=1 // pred_check
      _
    $region27: #{tpu_custom_call.1} parent=1 // pred_check_branch
      %90 = sbr.rel (0) target = $region29
    $region28: #{tpu_custom_call.1} parent=1 // pred_region
      _
    $region29: #{tpu_custom_call.1} parent=1 // pred_fallthru
      _
    // Predicated region
    $region30: #{tpu_custom_call.1} parent=1 // pred_check
      _
    $region31: #{tpu_custom_call.1} parent=1 // pred_check_branch
      %92 = sbr.rel (0) target = $region33
    $region32: #{tpu_custom_call.1} parent=1 // pred_region
      %93 = dma.done [#allocation3], 2048
    $region33: #{tpu_custom_call.1} parent=1 // pred_fallthru
      _
    // Predicated region
    $region34: #{tpu_custom_call.1} parent=1 // pred_check
      _
    $region35: #{tpu_custom_call.1} parent=1 // pred_check_branch
      %95 = sbr.rel (0) target = $region37
    $region36: #{tpu_custom_call.1} parent=1 // pred_region
      %96 = dma.done [#allocation6], 256
    $region37: #{tpu_custom_call.1} parent=1 // pred_fallthru
      _
    // Predicated region
    $region38: #{tpu_custom_call.1} parent=1 // pred_check
      _
    $region39: #{tpu_custom_call.1} parent=1 // pred_check_branch
      %98 = sbr.rel (0) target = $region41
    $region40: #{tpu_custom_call.1} parent=1 // pred_region
      %99 = dma.done [#allocation6], 512
    $region41: #{tpu_custom_call.1} parent=1 // pred_fallthru
      _
    // Predicated region
    $region42: #{tpu_custom_call.1} parent=1 // pred_check
      _
    $region43: #{tpu_custom_call.1} parent=1 // pred_check_branch
      %101 = sbr.rel (0) target = $region45
    $region44: #{tpu_custom_call.1} parent=1 // pred_region
      %102 = dma.done [#allocation9], 8192
    $region45: #{tpu_custom_call.1} parent=1 // pred_fallthru
      _
    // Predicated region
    $region46: #{tpu_custom_call.1} parent=1 // pred_check
      _
    $region47: #{tpu_custom_call.1} parent=1 // pred_check_branch
      %104 = sbr.rel (0) target = $region49
    $region48: #{tpu_custom_call.1} parent=1 // pred_region
      %105 = dma.done [#allocation9], 1024
    $region49: #{tpu_custom_call.1} parent=1 // pred_fallthru
      _
    // Predicated region
    $region50: #{tpu_custom_call.1} parent=1 // pred_check
      _
    $region51: #{tpu_custom_call.1} parent=1 // pred_check_branch
      %107 = sbr.rel (0) target = $region53
    $region52: #{tpu_custom_call.1} parent=1 // pred_region
      %108 = dma.done [#allocation12], 2048
    $region53: #{tpu_custom_call.1} parent=1 // pred_fallthru
      _
    %v110 = vld [vmem:[#allocation2] sm:$0xff]
    %v111 = vld [vmem:[#allocation2 + $0x8] sm:$0xff]
    %v112 = vld [vmem:[#allocation2 + $0x10] sm:$0xff]
    %v113 = vld [vmem:[#allocation2 + $0x18] sm:$0xff]
    %v114 = vld [vmem:[#allocation2 + $0x20] sm:$0xff]
    %v115 = vld [vmem:[#allocation2 + $0x28] sm:$0xff]
    %v116 = vld [vmem:[#allocation2 + $0x30] sm:$0xff]
    %v117 = vld [vmem:[#allocation2 + $0x38] sm:$0xff]
    %v118 = vld [vmem:[#allocation2 + $0x40] sm:$0xff]
    %v119 = vld [vmem:[#allocation2 + $0x48] sm:$0xff]
    %v120 = vld [vmem:[#allocation2 + $0x50] sm:$0xff]
    %v121 = vld [vmem:[#allocation2 + $0x58] sm:$0xff]
    %v122 = vld [vmem:[#allocation2 + $0x60] sm:$0xff]
    %v123 = vld [vmem:[#allocation2 + $0x68] sm:$0xff]
    %v124 = vld [vmem:[#allocation2 + $0x70] sm:$0xff]
    %v125 = vld [vmem:[#allocation2 + $0x78] sm:$0xff]
    %v142 = vcombine.low %v110, %v112
    %v143 = vcombine.high %v110, %v112
    %v144 = vcombine.low %v114, %v116
    %v145 = vcombine.high %v114, %v116
    %v147 = vunpack.c.l.s4 1983009808
    %v148 = vunpack.c.0.s8 %v147
    %v149 = vlaneseq
    %v150 = vshrl.u32 %v149, 7
    %v151 = vsub.s32 %v148, %v150
    %v152 = vrot.slane %v142, %v151
    %v154 = vunpack.c.l.s4 1983009808
    %v155 = vunpack.c.0.s8 %v154
    %v156 = vlaneseq
    %v157 = vshrl.u32 %v156, 7
    %v158 = vsub.s32 %v155, %v157
    %v159 = vrot.slane %v143, %v158
    %v161 = vunpack.c.l.s4 1983009808
    %v162 = vunpack.c.0.s8 %v161
    %v163 = vlaneseq
    %v164 = vshrl.u32 %v163, 7
    %v165 = vsub.s32 %v162, %v164
    %v166 = vrot.slane %v144, %v165
    %v168 = vunpack.c.l.s4 1983009808
    %v169 = vunpack.c.0.s8 %v168
    %v170 = vlaneseq
    %v171 = vshrl.u32 %v170, 7
    %v172 = vsub.s32 %v169, %v171
    %v173 = vrot.slane %v145, %v172
    %v174 = vcombine.low %v152, %v166
    %v175 = vcombine.high %v152, %v166
    %v176 = vcombine.low %v159, %v173
    %v177 = vcombine.high %v159, %v173
    %v178 = vcombine.low %v111, %v113
    %v179 = vcombine.high %v111, %v113
    %v180 = vcombine.low %v115, %v117
    %v181 = vcombine.high %v115, %v117
    %v183 = vunpack.c.l.s4 1983009808
    %v184 = vunpack.c.0.s8 %v183
    %v185 = vlaneseq
    %v186 = vshrl.u32 %v185, 7
    %v187 = vsub.s32 %v184, %v186
    %v188 = vrot.slane %v178, %v187
    %v190 = vunpack.c.l.s4 1983009808
    %v191 = vunpack.c.0.s8 %v190
    %v192 = vlaneseq
    %v193 = vshrl.u32 %v192, 7
    %v194 = vsub.s32 %v191, %v193
    %v195 = vrot.slane %v179, %v194
    %v197 = vunpack.c.l.s4 1983009808
    %v198 = vunpack.c.0.s8 %v197
    %v199 = vlaneseq
    %v200 = vshrl.u32 %v199, 7
    %v201 = vsub.s32 %v198, %v200
    %v202 = vrot.slane %v180, %v201
    %v204 = vunpack.c.l.s4 1983009808
    %v205 = vunpack.c.0.s8 %v204
    %v206 = vlaneseq
    %v207 = vshrl.u32 %v206, 7
    %v208 = vsub.s32 %v205, %v207
    %v209 = vrot.slane %v181, %v208
    %v210 = vcombine.low %v188, %v202
    %v211 = vcombine.high %v188, %v202
    %v212 = vcombine.low %v195, %v209
    %v213 = vcombine.high %v195, %v209
    %v214 = vcombine.low %v118, %v120
    %v215 = vcombine.high %v118, %v120
    %v216 = vcombine.low %v122, %v124
    %v217 = vcombine.high %v122, %v124
    %v219 = vunpack.c.l.s4 1983009808
    %v220 = vunpack.c.0.s8 %v219
    %v221 = vlaneseq
    %v222 = vshrl.u32 %v221, 7
    %v223 = vsub.s32 %v220, %v222
    %v224 = vrot.slane %v214, %v223
    %v226 = vunpack.c.l.s4 1983009808
    %v227 = vunpack.c.0.s8 %v226
    %v228 = vlaneseq
    %v229 = vshrl.u32 %v228, 7
    %v230 = vsub.s32 %v227, %v229
    %v231 = vrot.slane %v215, %v230
    %v233 = vunpack.c.l.s4 1983009808
    %v234 = vunpack.c.0.s8 %v233
    %v235 = vlaneseq
    %v236 = vshrl.u32 %v235, 7
    %v237 = vsub.s32 %v234, %v236
    %v238 = vrot.slane %v216, %v237
    %v240 = vunpack.c.l.s4 1983009808
    %v241 = vunpack.c.0.s8 %v240
    %v242 = vlaneseq
    %v243 = vshrl.u32 %v242, 7
    %v244 = vsub.s32 %v241, %v243
    %v245 = vrot.slane %v217, %v244
    %v246 = vcombine.low %v224, %v238
    %v247 = vcombine.high %v224, %v238
    %v248 = vcombine.low %v231, %v245
    %v249 = vcombine.high %v231, %v245
    %v250 = vcombine.low %v119, %v121
    %v251 = vcombine.high %v119, %v121
    %v252 = vcombine.low %v123, %v125
    %v253 = vcombine.high %v123, %v125
    %v255 = vunpack.c.l.s4 1983009808
    %v256 = vunpack.c.0.s8 %v255
    %v257 = vlaneseq
    %v258 = vshrl.u32 %v257, 7
    %v259 = vsub.s32 %v256, %v258
    %v260 = vrot.slane %v250, %v259
    %v262 = vunpack.c.l.s4 1983009808
    %v263 = vunpack.c.0.s8 %v262
    %v264 = vlaneseq
    %v265 = vshrl.u32 %v264, 7
    %v266 = vsub.s32 %v263, %v265
    %v267 = vrot.slane %v251, %v266
    %v269 = vunpack.c.l.s4 1983009808
    %v270 = vunpack.c.0.s8 %v269
    %v271 = vlaneseq
    %v272 = vshrl.u32 %v271, 7
    %v273 = vsub.s32 %v270, %v272
    %v274 = vrot.slane %v252, %v273
    %v276 = vunpack.c.l.s4 1983009808
    %v277 = vunpack.c.0.s8 %v276
    %v278 = vlaneseq
    %v279 = vshrl.u32 %v278, 7
    %v280 = vsub.s32 %v277, %v279
    %v281 = vrot.slane %v253, %v280
    %v282 = vcombine.low %v260, %v274
    %v283 = vcombine.high %v260, %v274
    %v284 = vcombine.low %v267, %v281
    %v285 = vcombine.high %v267, %v281
    %v302 = vpack.c.bf16 %v246, %v174
    %v303 = vpack.c.bf16 %v247, %v175
    %v304 = vpack.c.bf16 %v248, %v176
    %v305 = vpack.c.bf16 %v249, %v177
    %v306 = vpack.c.bf16 %v282, %v210
    %v307 = vpack.c.bf16 %v283, %v211
    %v308 = vpack.c.bf16 %v284, %v212
    %v309 = vpack.c.bf16 %v285, %v213
    %v310 = vld [vmem:[#allocation8] sm:$0xf]
    %v311 = vld [vmem:[#allocation8 + $0x4] sm:$0xf]
    %v312 = vld [vmem:[#allocation8 + $0x8] sm:$0xf]
    %v313 = vld [vmem:[#allocation8 + $0xc] sm:$0xf]
    %v314 = vld [vmem:[#allocation8 + $0x10] sm:$0xf]
    %v315 = vld [vmem:[#allocation8 + $0x14] sm:$0xf]
    %v316 = vld [vmem:[#allocation8 + $0x18] sm:$0xf]
    %v317 = vld [vmem:[#allocation8 + $0x1c] sm:$0xf]
    %v318 = vld [vmem:[#allocation8 + $0x20] sm:$0xf]
    %v319 = vld [vmem:[#allocation8 + $0x24] sm:$0xf]
    %v320 = vld [vmem:[#allocation8 + $0x28] sm:$0xf]
    %v321 = vld [vmem:[#allocation8 + $0x2c] sm:$0xf]
    %v322 = vld [vmem:[#allocation8 + $0x30] sm:$0xf]
    %v323 = vld [vmem:[#allocation8 + $0x34] sm:$0xf]
    %v324 = vld [vmem:[#allocation8 + $0x38] sm:$0xf]
    %v325 = vld [vmem:[#allocation8 + $0x3c] sm:$0xf]
    %v326 = vld [vmem:[#allocation8 + $0x40] sm:$0xf]
    %v327 = vld [vmem:[#allocation8 + $0x44] sm:$0xf]
    %v328 = vld [vmem:[#allocation8 + $0x48] sm:$0xf]
    %v329 = vld [vmem:[#allocation8 + $0x4c] sm:$0xf]
    %v330 = vld [vmem:[#allocation8 + $0x50] sm:$0xf]
    %v331 = vld [vmem:[#allocation8 + $0x54] sm:$0xf]
    %v332 = vld [vmem:[#allocation8 + $0x58] sm:$0xf]
    %v333 = vld [vmem:[#allocation8 + $0x5c] sm:$0xf]
    %v334 = vld [vmem:[#allocation8 + $0x60] sm:$0xf]
    %v335 = vld [vmem:[#allocation8 + $0x64] sm:$0xf]
    %v336 = vld [vmem:[#allocation8 + $0x68] sm:$0xf]
    %v337 = vld [vmem:[#allocation8 + $0x6c] sm:$0xf]
    %v338 = vld [vmem:[#allocation8 + $0x70] sm:$0xf]
    %v339 = vld [vmem:[#allocation8 + $0x74] sm:$0xf]
    %v340 = vld [vmem:[#allocation8 + $0x78] sm:$0xf]
    %v341 = vld [vmem:[#allocation8 + $0x7c] sm:$0xf]
    %v342 = vld [vmem:[#allocation8 + $0x80] sm:$0xf]
    %v343 = vld [vmem:[#allocation8 + $0x84] sm:$0xf]
    %v344 = vld [vmem:[#allocation8 + $0x88] sm:$0xf]
    %v345 = vld [vmem:[#allocation8 + $0x8c] sm:$0xf]
    %v346 = vld [vmem:[#allocation8 + $0x90] sm:$0xf]
    %v347 = vld [vmem:[#allocation8 + $0x94] sm:$0xf]
    %v348 = vld [vmem:[#allocation8 + $0x98] sm:$0xf]
    %v349 = vld [vmem:[#allocation8 + $0x9c] sm:$0xf]
    %v350 = vld [vmem:[#allocation8 + $0xa0] sm:$0xf]
    %v351 = vld [vmem:[#allocation8 + $0xa4] sm:$0xf]
    %v352 = vld [vmem:[#allocation8 + $0xa8] sm:$0xf]
    %v353 = vld [vmem:[#allocation8 + $0xac] sm:$0xf]
    %v354 = vld [vmem:[#allocation8 + $0xb0] sm:$0xf]
    %v355 = vld [vmem:[#allocation8 + $0xb4] sm:$0xf]
    %v356 = vld [vmem:[#allocation8 + $0xb8] sm:$0xf]
    %v357 = vld [vmem:[#allocation8 + $0xbc] sm:$0xf]
    %v358 = vld [vmem:[#allocation8 + $0xc0] sm:$0xf]
    %v359 = vld [vmem:[#allocation8 + $0xc4] sm:$0xf]
    %v360 = vld [vmem:[#allocation8 + $0xc8] sm:$0xf]
    %v361 = vld [vmem:[#allocation8 + $0xcc] sm:$0xf]
    %v362 = vld [vmem:[#allocation8 + $0xd0] sm:$0xf]
    %v363 = vld [vmem:[#allocation8 + $0xd4] sm:$0xf]
    %v364 = vld [vmem:[#allocation8 + $0xd8] sm:$0xf]
    %v365 = vld [vmem:[#allocation8 + $0xdc] sm:$0xf]
    %v366 = vld [vmem:[#allocation8 + $0xe0] sm:$0xf]
    %v367 = vld [vmem:[#allocation8 + $0xe4] sm:$0xf]
    %v368 = vld [vmem:[#allocation8 + $0xe8] sm:$0xf]
    %v369 = vld [vmem:[#allocation8 + $0xec] sm:$0xf]
    %v370 = vld [vmem:[#allocation8 + $0xf0] sm:$0xf]
    %v371 = vld [vmem:[#allocation8 + $0xf4] sm:$0xf]
    %v372 = vld [vmem:[#allocation8 + $0xf8] sm:$0xf]
    %v373 = vld [vmem:[#allocation8 + $0xfc] sm:$0xf]
    %v374 = vld [vmem:[#allocation8 + $0x100] sm:$0xf]
    %v375 = vld [vmem:[#allocation8 + $0x104] sm:$0xf]
    %v376 = vld [vmem:[#allocation8 + $0x108] sm:$0xf]
    %v377 = vld [vmem:[#allocation8 + $0x10c] sm:$0xf]
    %v378 = vld [vmem:[#allocation8 + $0x110] sm:$0xf]
    %v379 = vld [vmem:[#allocation8 + $0x114] sm:$0xf]
    %v380 = vld [vmem:[#allocation8 + $0x118] sm:$0xf]
    %v381 = vld [vmem:[#allocation8 + $0x11c] sm:$0xf]
    %v382 = vld [vmem:[#allocation8 + $0x120] sm:$0xf]
    %v383 = vld [vmem:[#allocation8 + $0x124] sm:$0xf]
    %v384 = vld [vmem:[#allocation8 + $0x128] sm:$0xf]
    %v385 = vld [vmem:[#allocation8 + $0x12c] sm:$0xf]
    %v386 = vld [vmem:[#allocation8 + $0x130] sm:$0xf]
    %v387 = vld [vmem:[#allocation8 + $0x134] sm:$0xf]
    %v388 = vld [vmem:[#allocation8 + $0x138] sm:$0xf]
    %v389 = vld [vmem:[#allocation8 + $0x13c] sm:$0xf]
    %v390 = vld [vmem:[#allocation8 + $0x140] sm:$0xf]
    %v391 = vld [vmem:[#allocation8 + $0x144] sm:$0xf]
    %v392 = vld [vmem:[#allocation8 + $0x148] sm:$0xf]
    %v393 = vld [vmem:[#allocation8 + $0x14c] sm:$0xf]
    %v394 = vld [vmem:[#allocation8 + $0x150] sm:$0xf]
    %v395 = vld [vmem:[#allocation8 + $0x154] sm:$0xf]
    %v396 = vld [vmem:[#allocation8 + $0x158] sm:$0xf]
    %v397 = vld [vmem:[#allocation8 + $0x15c] sm:$0xf]
    %v398 = vld [vmem:[#allocation8 + $0x160] sm:$0xf]
    %v399 = vld [vmem:[#allocation8 + $0x164] sm:$0xf]
    %v400 = vld [vmem:[#allocation8 + $0x168] sm:$0xf]
    %v401 = vld [vmem:[#allocation8 + $0x16c] sm:$0xf]
    %v402 = vld [vmem:[#allocation8 + $0x170] sm:$0xf]
    %v403 = vld [vmem:[#allocation8 + $0x174] sm:$0xf]
    %v404 = vld [vmem:[#allocation8 + $0x178] sm:$0xf]
    %v405 = vld [vmem:[#allocation8 + $0x17c] sm:$0xf]
    %v406 = vld [vmem:[#allocation8 + $0x180] sm:$0xf]
    %v407 = vld [vmem:[#allocation8 + $0x184] sm:$0xf]
    %v408 = vld [vmem:[#allocation8 + $0x188] sm:$0xf]
    %v409 = vld [vmem:[#allocation8 + $0x18c] sm:$0xf]
    %v410 = vld [vmem:[#allocation8 + $0x190] sm:$0xf]
    %v411 = vld [vmem:[#allocation8 + $0x194] sm:$0xf]
    %v412 = vld [vmem:[#allocation8 + $0x198] sm:$0xf]
    %v413 = vld [vmem:[#allocation8 + $0x19c] sm:$0xf]
    %v414 = vld [vmem:[#allocation8 + $0x1a0] sm:$0xf]
    %v415 = vld [vmem:[#allocation8 + $0x1a4] sm:$0xf]
    %v416 = vld [vmem:[#allocation8 + $0x1a8] sm:$0xf]
    %v417 = vld [vmem:[#allocation8 + $0x1ac] sm:$0xf]
    %v418 = vld [vmem:[#allocation8 + $0x1b0] sm:$0xf]
    %v419 = vld [vmem:[#allocation8 + $0x1b4] sm:$0xf]
    %v420 = vld [vmem:[#allocation8 + $0x1b8] sm:$0xf]
    %v421 = vld [vmem:[#allocation8 + $0x1bc] sm:$0xf]
    %v422 = vld [vmem:[#allocation8 + $0x1c0] sm:$0xf]
    %v423 = vld [vmem:[#allocation8 + $0x1c4] sm:$0xf]
    %v424 = vld [vmem:[#allocation8 + $0x1c8] sm:$0xf]
    %v425 = vld [vmem:[#allocation8 + $0x1cc] sm:$0xf]
    %v426 = vld [vmem:[#allocation8 + $0x1d0] sm:$0xf]
    %v427 = vld [vmem:[#allocation8 + $0x1d4] sm:$0xf]
    %v428 = vld [vmem:[#allocation8 + $0x1d8] sm:$0xf]
    %v429 = vld [vmem:[#allocation8 + $0x1dc] sm:$0xf]
    %v430 = vld [vmem:[#allocation8 + $0x1e0] sm:$0xf]
    %v431 = vld [vmem:[#allocation8 + $0x1e4] sm:$0xf]
    %v432 = vld [vmem:[#allocation8 + $0x1e8] sm:$0xf]
    %v433 = vld [vmem:[#allocation8 + $0x1ec] sm:$0xf]
    %v434 = vld [vmem:[#allocation8 + $0x1f0] sm:$0xf]
    %v435 = vld [vmem:[#allocation8 + $0x1f4] sm:$0xf]
    %v436 = vld [vmem:[#allocation8 + $0x1f8] sm:$0xf]
    %v437 = vld [vmem:[#allocation8 + $0x1fc] sm:$0xf]
    %v438 = vld [vmem:[#allocation5] sm:$0xff]
    %v439 = vld [vmem:[#allocation5 + $0x8] sm:$0xff]
    %v440 = vpack.c.bf16 %v439, %v438
    %v441 = vld [vmem:[#allocation10] sm:$0xf]
    %v442 = vld [vmem:[#allocation10 + $0x4] sm:$0xf]
    %v443 = vld [vmem:[#allocation10 + $0x8] sm:$0xf]
    %v444 = vld [vmem:[#allocation10 + $0xc] sm:$0xf]
    %v445 = vld [vmem:[#allocation10 + $0x10] sm:$0xf]
    %v446 = vld [vmem:[#allocation10 + $0x14] sm:$0xf]
    %v447 = vld [vmem:[#allocation10 + $0x18] sm:$0xf]
    %v448 = vld [vmem:[#allocation10 + $0x1c] sm:$0xf]
    %v449 = vld [vmem:[#allocation10 + $0x20] sm:$0xf]
    %v450 = vld [vmem:[#allocation10 + $0x24] sm:$0xf]
    %v451 = vld [vmem:[#allocation10 + $0x28] sm:$0xf]
    %v452 = vld [vmem:[#allocation10 + $0x2c] sm:$0xf]
    %v453 = vld [vmem:[#allocation10 + $0x30] sm:$0xf]
    %v454 = vld [vmem:[#allocation10 + $0x34] sm:$0xf]
    %v455 = vld [vmem:[#allocation10 + $0x38] sm:$0xf]
    %v456 = vld [vmem:[#allocation10 + $0x3c] sm:$0xf]
    %v473 = vunpack.c.l.b16 %v441
    %v474 = vunpack.c.l.b16 %v442
    %v475 = vunpack.c.l.b16 %v443
    %v476 = vunpack.c.l.b16 %v444
    %v477 = vunpack.c.l.b16 %v445
    %v478 = vunpack.c.l.b16 %v446
    %v479 = vunpack.c.l.b16 %v447
    %v480 = vunpack.c.l.b16 %v448
    %v481 = vunpack.c.l.b16 %v449
    %v482 = vunpack.c.l.b16 %v450
    %v483 = vunpack.c.l.b16 %v451
    %v484 = vunpack.c.l.b16 %v452
    %v485 = vunpack.c.l.b16 %v453
    %v486 = vunpack.c.l.b16 %v454
    %v487 = vunpack.c.l.b16 %v455
    %v488 = vunpack.c.l.b16 %v456
    %v489 = vpack.c.b16 %v474, %v473
    %v490 = vpack.c.b16 %v476, %v475
    %v491 = vpack.c.b16 %v478, %v477
    %v492 = vpack.c.b16 %v480, %v479
    %v493 = vpack.c.b16 %v482, %v481
    %v494 = vpack.c.b16 %v484, %v483
    %v495 = vpack.c.b16 %v486, %v485
    %v496 = vpack.c.b16 %v488, %v487
    %505 = vmatprep.subr.bf16.mxu0 0
    %506 = vmatpush1.bf16.msra.mxu0 %v496
    %507 = vmatprep.subr.bf16.mxu0 0
    %508 = vmatpush1.bf16.msra.mxu0 %v495
    %509 = vmatprep.subr.bf16.mxu0 0
    %510 = vmatpush1.bf16.msra.mxu0 %v494
    %511 = vmatprep.subr.bf16.mxu0 0
    %512 = vmatpush1.bf16.msra.mxu0 %v493
    %513 = vmatprep.subr.bf16.mxu0 0
    %514 = vmatpush1.bf16.msra.mxu0 %v492
    %515 = vmatprep.subr.bf16.mxu0 0
    %516 = vmatpush1.bf16.msra.mxu0 %v491
    %517 = vmatprep.subr.bf16.mxu0 0
    %518 = vmatpush1.bf16.msra.mxu0 %v490
    %519 = vmatprep.subr.bf16.mxu0 0
    %520 = vmatpush1.bf16.msra.mxu0 %v489
    %521 = vmatprep.subr.bf16.mxu0 0
    %522 = vmatpush2.bf16.msra.mxu0 0
    %523 = vmatprep.subr.bf16.mxu0 0
    %524 = vmatpush2.bf16.msra.mxu0 0
    %525 = vmatprep.subr.bf16.mxu0 0
    %526 = vmatpush2.bf16.msra.mxu0 0
    %527 = vmatprep.subr.bf16.mxu0 0
    %528 = vmatpush2.bf16.msra.mxu0 0
    %529 = vmatprep.subr.bf16.mxu0 0
    %530 = vmatpush2.bf16.msra.mxu0 0
    %531 = vmatprep.subr.bf16.mxu0 0
    %532 = vmatpush2.bf16.msra.mxu0 0
    %533 = vmatprep.subr.bf16.mxu0 0
    %534 = vmatpush2.bf16.msra.mxu0 0
    %535 = vmatprep.subr.bf16.mxu0 0
    %536 = vmatpush2.bf16.msra.mxu0 0
    %537 = vmatprep.mubr.bf16.mxu0 0
    %538 = vmatmul.mubr.bf16.gmra.mxu0 %v440
    %v539 = vpop.f32.mrf.mxu0
    %v540 = vadd.f32 0.0, %v539
    %v541 = vpop.f32.mrf.mxu0
    %v542 = vpop.f32.mrf.mxu0
    %v543 = vadd.f32 0.0, %v542
    %v544 = vpop.f32.mrf.mxu0
    %545 = vdwg.mxu0
    %v674 = vunpack.c.l.b16 %v310
    %v675 = vunpack.c.l.b16 %v311
    %v676 = vunpack.c.l.b16 %v312
    %v677 = vunpack.c.l.b16 %v313
    %v678 = vunpack.c.l.b16 %v314
    %v679 = vunpack.c.l.b16 %v315
    %v680 = vunpack.c.l.b16 %v316
    %v681 = vunpack.c.l.b16 %v317
    %v682 = vunpack.c.l.b16 %v318
    %v683 = vunpack.c.l.b16 %v319
    %v684 = vunpack.c.l.b16 %v320
    %v685 = vunpack.c.l.b16 %v321
    %v686 = vunpack.c.l.b16 %v322
    %v687 = vunpack.c.l.b16 %v323
    %v688 = vunpack.c.l.b16 %v324
    %v689 = vunpack.c.l.b16 %v325
    %v690 = vunpack.c.l.b16 %v326
    %v691 = vunpack.c.l.b16 %v327
    %v692 = vunpack.c.l.b16 %v328
    %v693 = vunpack.c.l.b16 %v329
    %v694 = vunpack.c.l.b16 %v330
    %v695 = vunpack.c.l.b16 %v331
    %v696 = vunpack.c.l.b16 %v332
    %v697 = vunpack.c.l.b16 %v333
    %v698 = vunpack.c.l.b16 %v334
    %v699 = vunpack.c.l.b16 %v335
    %v700 = vunpack.c.l.b16 %v336
    %v701 = vunpack.c.l.b16 %v337
    %v702 = vunpack.c.l.b16 %v338
    %v703 = vunpack.c.l.b16 %v339
    %v704 = vunpack.c.l.b16 %v340
    %v705 = vunpack.c.l.b16 %v341
    %v706 = vunpack.c.l.b16 %v342
    %v707 = vunpack.c.l.b16 %v343
    %v708 = vunpack.c.l.b16 %v344
    %v709 = vunpack.c.l.b16 %v345
    %v710 = vunpack.c.l.b16 %v346
    %v711 = vunpack.c.l.b16 %v347
    %v712 = vunpack.c.l.b16 %v348
    %v713 = vunpack.c.l.b16 %v349
    %v714 = vunpack.c.l.b16 %v350
    %v715 = vunpack.c.l.b16 %v351
    %v716 = vunpack.c.l.b16 %v352
    %v717 = vunpack.c.l.b16 %v353
    %v718 = vunpack.c.l.b16 %v354
    %v719 = vunpack.c.l.b16 %v355
    %v720 = vunpack.c.l.b16 %v356
    %v721 = vunpack.c.l.b16 %v357
    %v722 = vunpack.c.l.b16 %v358
    %v723 = vunpack.c.l.b16 %v359
    %v724 = vunpack.c.l.b16 %v360
    %v725 = vunpack.c.l.b16 %v361
    %v726 = vunpack.c.l.b16 %v362
    %v727 = vunpack.c.l.b16 %v363
    %v728 = vunpack.c.l.b16 %v364
    %v729 = vunpack.c.l.b16 %v365
    %v730 = vunpack.c.l.b16 %v366
    %v731 = vunpack.c.l.b16 %v367
    %v732 = vunpack.c.l.b16 %v368
    %v733 = vunpack.c.l.b16 %v369
    %v734 = vunpack.c.l.b16 %v370
    %v735 = vunpack.c.l.b16 %v371
    %v736 = vunpack.c.l.b16 %v372
    %v737 = vunpack.c.l.b16 %v373
    %v738 = vunpack.c.l.b16 %v374
    %v739 = vunpack.c.l.b16 %v375
    %v740 = vunpack.c.l.b16 %v376
    %v741 = vunpack.c.l.b16 %v377
    %v742 = vunpack.c.l.b16 %v378
    %v743 = vunpack.c.l.b16 %v379
    %v744 = vunpack.c.l.b16 %v380
    %v745 = vunpack.c.l.b16 %v381
    %v746 = vunpack.c.l.b16 %v382
    %v747 = vunpack.c.l.b16 %v383
    %v748 = vunpack.c.l.b16 %v384
    %v749 = vunpack.c.l.b16 %v385
    %v750 = vunpack.c.l.b16 %v386
    %v751 = vunpack.c.l.b16 %v387
    %v752 = vunpack.c.l.b16 %v388
    %v753 = vunpack.c.l.b16 %v389
    %v754 = vunpack.c.l.b16 %v390
    %v755 = vunpack.c.l.b16 %v391
    %v756 = vunpack.c.l.b16 %v392
    %v757 = vunpack.c.l.b16 %v393
    %v758 = vunpack.c.l.b16 %v394
    %v759 = vunpack.c.l.b16 %v395
    %v760 = vunpack.c.l.b16 %v396
    %v761 = vunpack.c.l.b16 %v397
    %v762 = vunpack.c.l.b16 %v398
    %v763 = vunpack.c.l.b16 %v399
    %v764 = vunpack.c.l.b16 %v400
    %v765 = vunpack.c.l.b16 %v401
    %v766 = vunpack.c.l.b16 %v402
    %v767 = vunpack.c.l.b16 %v403
    %v768 = vunpack.c.l.b16 %v404
    %v769 = vunpack.c.l.b16 %v405
    %v770 = vunpack.c.l.b16 %v406
    %v771 = vunpack.c.l.b16 %v407
    %v772 = vunpack.c.l.b16 %v408
    %v773 = vunpack.c.l.b16 %v409
    %v774 = vunpack.c.l.b16 %v410
    %v775 = vunpack.c.l.b16 %v411
    %v776 = vunpack.c.l.b16 %v412
    %v777 = vunpack.c.l.b16 %v413
    %v778 = vunpack.c.l.b16 %v414
    %v779 = vunpack.c.l.b16 %v415
    %v780 = vunpack.c.l.b16 %v416
    %v781 = vunpack.c.l.b16 %v417
    %v782 = vunpack.c.l.b16 %v418
    %v783 = vunpack.c.l.b16 %v419
    %v784 = vunpack.c.l.b16 %v420
    %v785 = vunpack.c.l.b16 %v421
    %v786 = vunpack.c.l.b16 %v422
    %v787 = vunpack.c.l.b16 %v423
    %v788 = vunpack.c.l.b16 %v424
    %v789 = vunpack.c.l.b16 %v425
    %v790 = vunpack.c.l.b16 %v426
    %v791 = vunpack.c.l.b16 %v427
    %v792 = vunpack.c.l.b16 %v428
    %v793 = vunpack.c.l.b16 %v429
    %v794 = vunpack.c.l.b16 %v430
    %v795 = vunpack.c.l.b16 %v431
    %v796 = vunpack.c.l.b16 %v432
    %v797 = vunpack.c.l.b16 %v433
    %v798 = vunpack.c.l.b16 %v434
    %v799 = vunpack.c.l.b16 %v435
    %v800 = vunpack.c.l.b16 %v436
    %v801 = vunpack.c.l.b16 %v437
    %v802 = vpack.c.b16 %v675, %v674
    %v803 = vpack.c.b16 %v677, %v676
    %v804 = vpack.c.b16 %v679, %v678
    %v805 = vpack.c.b16 %v681, %v680
    %v806 = vpack.c.b16 %v683, %v682
    %v807 = vpack.c.b16 %v685, %v684
    %v808 = vpack.c.b16 %v687, %v686
    %v809 = vpack.c.b16 %v689, %v688
    %v810 = vpack.c.b16 %v691, %v690
    %v811 = vpack.c.b16 %v693, %v692
    %v812 = vpack.c.b16 %v695, %v694
    %v813 = vpack.c.b16 %v697, %v696
    %v814 = vpack.c.b16 %v699, %v698
    %v815 = vpack.c.b16 %v701, %v700
    %v816 = vpack.c.b16 %v703, %v702
    %v817 = vpack.c.b16 %v705, %v704
    %v818 = vpack.c.b16 %v707, %v706
    %v819 = vpack.c.b16 %v709, %v708
    %v820 = vpack.c.b16 %v711, %v710
    %v821 = vpack.c.b16 %v713, %v712
    %v822 = vpack.c.b16 %v715, %v714
    %v823 = vpack.c.b16 %v717, %v716
    %v824 = vpack.c.b16 %v719, %v718
    %v825 = vpack.c.b16 %v721, %v720
    %v826 = vpack.c.b16 %v723, %v722
    %v827 = vpack.c.b16 %v725, %v724
    %v828 = vpack.c.b16 %v727, %v726
    %v829 = vpack.c.b16 %v729, %v728
    %v830 = vpack.c.b16 %v731, %v730
    %v831 = vpack.c.b16 %v733, %v732
    %v832 = vpack.c.b16 %v735, %v734
    %v833 = vpack.c.b16 %v737, %v736
    %v834 = vpack.c.b16 %v739, %v738
    %v835 = vpack.c.b16 %v741, %v740
    %v836 = vpack.c.b16 %v743, %v742
    %v837 = vpack.c.b16 %v745, %v744
    %v838 = vpack.c.b16 %v747, %v746
    %v839 = vpack.c.b16 %v749, %v748
    %v840 = vpack.c.b16 %v751, %v750
    %v841 = vpack.c.b16 %v753, %v752
    %v842 = vpack.c.b16 %v755, %v754
    %v843 = vpack.c.b16 %v757, %v756
    %v844 = vpack.c.b16 %v759, %v758
    %v845 = vpack.c.b16 %v761, %v760
    %v846 = vpack.c.b16 %v763, %v762
    %v847 = vpack.c.b16 %v765, %v764
    %v848 = vpack.c.b16 %v767, %v766
    %v849 = vpack.c.b16 %v769, %v768
    %v850 = vpack.c.b16 %v771, %v770
    %v851 = vpack.c.b16 %v773, %v772
    %v852 = vpack.c.b16 %v775, %v774
    %v853 = vpack.c.b16 %v777, %v776
    %v854 = vpack.c.b16 %v779, %v778
    %v855 = vpack.c.b16 %v781, %v780
    %v856 = vpack.c.b16 %v783, %v782
    %v857 = vpack.c.b16 %v785, %v784
    %v858 = vpack.c.b16 %v787, %v786
    %v859 = vpack.c.b16 %v789, %v788
    %v860 = vpack.c.b16 %v791, %v790
    %v861 = vpack.c.b16 %v793, %v792
    %v862 = vpack.c.b16 %v795, %v794
    %v863 = vpack.c.b16 %v797, %v796
    %v864 = vpack.c.b16 %v799, %v798
    %v865 = vpack.c.b16 %v801, %v800
    %930 = vmatprep.subr.bf16.mxu0 0
    %931 = vmatpush1.bf16.msra.mxu0 %v809
    %932 = vmatprep.subr.bf16.mxu0 0
    %933 = vmatpush1.bf16.msra.mxu0 %v808
    %934 = vmatprep.subr.bf16.mxu0 0
    %935 = vmatpush1.bf16.msra.mxu0 %v807
    %936 = vmatprep.subr.bf16.mxu0 0
    %937 = vmatpush1.bf16.msra.mxu0 %v806
    %938 = vmatprep.subr.bf16.mxu0 0
    %939 = vmatpush1.bf16.msra.mxu0 %v805
    %940 = vmatprep.subr.bf16.mxu0 0
    %941 = vmatpush1.bf16.msra.mxu0 %v804
    %942 = vmatprep.subr.bf16.mxu0 0
    %943 = vmatpush1.bf16.msra.mxu0 %v803
    %944 = vmatprep.subr.bf16.mxu0 0
    %945 = vmatpush1.bf16.msra.mxu0 %v802
    %946 = vmatprep.subr.bf16.mxu0 0
    %947 = vmatpush2.bf16.msra.mxu0 %v817
    %948 = vmatprep.subr.bf16.mxu0 0
    %949 = vmatpush2.bf16.msra.mxu0 %v816
    %950 = vmatprep.subr.bf16.mxu0 0
    %951 = vmatpush2.bf16.msra.mxu0 %v815
    %952 = vmatprep.subr.bf16.mxu0 0
    %953 = vmatpush2.bf16.msra.mxu0 %v814
    %954 = vmatprep.subr.bf16.mxu0 0
    %955 = vmatpush2.bf16.msra.mxu0 %v813
    %956 = vmatprep.subr.bf16.mxu0 0
    %957 = vmatpush2.bf16.msra.mxu0 %v812
    %958 = vmatprep.subr.bf16.mxu0 0
    %959 = vmatpush2.bf16.msra.mxu0 %v811
    %960 = vmatprep.subr.bf16.mxu0 0
    %961 = vmatpush2.bf16.msra.mxu0 %v810
    %962 = vmatprep.mubr.bf16.mxu0 %v303
    %963 = vmatmul.mubr.bf16.gmra.mxu0 %v302
    %v964 = vpop.f32.mrf.mxu0
    %v965 = vadd.f32 %v540, %v964
    %v966 = vpop.f32.mrf.mxu0
    %v967 = vpop.f32.mrf.mxu0
    %v968 = vadd.f32 %v543, %v967
    %v969 = vpop.f32.mrf.mxu0
    %970 = vdwg.mxu0
    %971 = vmatprep.subr.bf16.mxu0 0
    %972 = vmatpush1.bf16.msra.mxu0 %v825
    %973 = vmatprep.subr.bf16.mxu0 0
    %974 = vmatpush1.bf16.msra.mxu0 %v824
    %975 = vmatprep.subr.bf16.mxu0 0
    %976 = vmatpush1.bf16.msra.mxu0 %v823
    %977 = vmatprep.subr.bf16.mxu0 0
    %978 = vmatpush1.bf16.msra.mxu0 %v822
    %979 = vmatprep.subr.bf16.mxu0 0
    %980 = vmatpush1.bf16.msra.mxu0 %v821
    %981 = vmatprep.subr.bf16.mxu0 0
    %982 = vmatpush1.bf16.msra.mxu0 %v820
    %983 = vmatprep.subr.bf16.mxu0 0
    %984 = vmatpush1.bf16.msra.mxu0 %v819
    %985 = vmatprep.subr.bf16.mxu0 0
    %986 = vmatpush1.bf16.msra.mxu0 %v818
    %987 = vmatprep.subr.bf16.mxu0 0
    %988 = vmatpush2.bf16.msra.mxu0 %v833
    %989 = vmatprep.subr.bf16.mxu0 0
    %990 = vmatpush2.bf16.msra.mxu0 %v832
    %991 = vmatprep.subr.bf16.mxu0 0
    %992 = vmatpush2.bf16.msra.mxu0 %v831
    %993 = vmatprep.subr.bf16.mxu0 0
    %994 = vmatpush2.bf16.msra.mxu0 %v830
    %995 = vmatprep.subr.bf16.mxu0 0
    %996 = vmatpush2.bf16.msra.mxu0 %v829
    %997 = vmatprep.subr.bf16.mxu0 0
    %998 = vmatpush2.bf16.msra.mxu0 %v828
    %999 = vmatprep.subr.bf16.mxu0 0
    %1000 = vmatpush2.bf16.msra.mxu0 %v827
    %1001 = vmatprep.subr.bf16.mxu0 0
    %1002 = vmatpush2.bf16.msra.mxu0 %v826
    %1003 = vmatprep.mubr.bf16.mxu0 %v305
    %1004 = vmatmul.mubr.bf16.gmra.mxu0 %v304
    %v1005 = vpop.f32.mrf.mxu0
    %v1006 = vadd.f32 %v965, %v1005
    %v1007 = vpop.f32.mrf.mxu0
    %v1008 = vpop.f32.mrf.mxu0
    %v1009 = vadd.f32 %v968, %v1008
    %v1010 = vpop.f32.mrf.mxu0
    %1011 = vdwg.mxu0
    %1012 = vmatprep.subr.bf16.mxu0 0
    %1013 = vmatpush1.bf16.msra.mxu0 %v841
    %1014 = vmatprep.subr.bf16.mxu0 0
    %1015 = vmatpush1.bf16.msra.mxu0 %v840
    %1016 = vmatprep.subr.bf16.mxu0 0
    %1017 = vmatpush1.bf16.msra.mxu0 %v839
    %1018 = vmatprep.subr.bf16.mxu0 0
    %1019 = vmatpush1.bf16.msra.mxu0 %v838
    %1020 = vmatprep.subr.bf16.mxu0 0
    %1021 = vmatpush1.bf16.msra.mxu0 %v837
    %1022 = vmatprep.subr.bf16.mxu0 0
    %1023 = vmatpush1.bf16.msra.mxu0 %v836
    %1024 = vmatprep.subr.bf16.mxu0 0
    %1025 = vmatpush1.bf16.msra.mxu0 %v835
    %1026 = vmatprep.subr.bf16.mxu0 0
    %1027 = vmatpush1.bf16.msra.mxu0 %v834
    %1028 = vmatprep.subr.bf16.mxu0 0
    %1029 = vmatpush2.bf16.msra.mxu0 %v849
    %1030 = vmatprep.subr.bf16.mxu0 0
    %1031 = vmatpush2.bf16.msra.mxu0 %v848
    %1032 = vmatprep.subr.bf16.mxu0 0
    %1033 = vmatpush2.bf16.msra.mxu0 %v847
    %1034 = vmatprep.subr.bf16.mxu0 0
    %1035 = vmatpush2.bf16.msra.mxu0 %v846
    %1036 = vmatprep.subr.bf16.mxu0 0
    %1037 = vmatpush2.bf16.msra.mxu0 %v845
    %1038 = vmatprep.subr.bf16.mxu0 0
    %1039 = vmatpush2.bf16.msra.mxu0 %v844
    %1040 = vmatprep.subr.bf16.mxu0 0
    %1041 = vmatpush2.bf16.msra.mxu0 %v843
    %1042 = vmatprep.subr.bf16.mxu0 0
    %1043 = vmatpush2.bf16.msra.mxu0 %v842
    %1044 = vmatprep.mubr.bf16.mxu0 %v307
    %1045 = vmatmul.mubr.bf16.gmra.mxu0 %v306
    %v1046 = vpop.f32.mrf.mxu0
    %v1047 = vadd.f32 %v1006, %v1046
    %v1048 = vpop.f32.mrf.mxu0
    %v1049 = vpop.f32.mrf.mxu0
    %v1050 = vadd.f32 %v1009, %v1049
    %v1051 = vpop.f32.mrf.mxu0
    %1052 = vdwg.mxu0
    %1053 = vmatprep.subr.bf16.mxu0 0
    %1054 = vmatpush1.bf16.msra.mxu0 %v857
    %1055 = vmatprep.subr.bf16.mxu0 0
    %1056 = vmatpush1.bf16.msra.mxu0 %v856
    %1057 = vmatprep.subr.bf16.mxu0 0
    %1058 = vmatpush1.bf16.msra.mxu0 %v855
    %1059 = vmatprep.subr.bf16.mxu0 0
    %1060 = vmatpush1.bf16.msra.mxu0 %v854
    %1061 = vmatprep.subr.bf16.mxu0 0
    %1062 = vmatpush1.bf16.msra.mxu0 %v853
    %1063 = vmatprep.subr.bf16.mxu0 0
    %1064 = vmatpush1.bf16.msra.mxu0 %v852
    %1065 = vmatprep.subr.bf16.mxu0 0
    %1066 = vmatpush1.bf16.msra.mxu0 %v851
    %1067 = vmatprep.subr.bf16.mxu0 0
    %1068 = vmatpush1.bf16.msra.mxu0 %v850
    %1069 = vmatprep.subr.bf16.mxu0 0
    %1070 = vmatpush2.bf16.msra.mxu0 %v865
    %1071 = vmatprep.subr.bf16.mxu0 0
    %1072 = vmatpush2.bf16.msra.mxu0 %v864
    %1073 = vmatprep.subr.bf16.mxu0 0
    %1074 = vmatpush2.bf16.msra.mxu0 %v863
    %1075 = vmatprep.subr.bf16.mxu0 0
    %1076 = vmatpush2.bf16.msra.mxu0 %v862
    %1077 = vmatprep.subr.bf16.mxu0 0
    %1078 = vmatpush2.bf16.msra.mxu0 %v861
    %1079 = vmatprep.subr.bf16.mxu0 0
    %1080 = vmatpush2.bf16.msra.mxu0 %v860
    %1081 = vmatprep.subr.bf16.mxu0 0
    %1082 = vmatpush2.bf16.msra.mxu0 %v859
    %1083 = vmatprep.subr.bf16.mxu0 0
    %1084 = vmatpush2.bf16.msra.mxu0 %v858
    %1085 = vmatprep.mubr.bf16.mxu0 %v309
    %1086 = vmatmul.mubr.bf16.gmra.mxu0 %v308
    %v1087 = vpop.f32.mrf.mxu0
    %v1088 = vadd.f32 %v1047, %v1087
    %v1089 = vpop.f32.mrf.mxu0
    %v1090 = vpop.f32.mrf.mxu0
    %v1091 = vadd.f32 %v1050, %v1090
    %v1092 = vpop.f32.mrf.mxu0
    %1093 = vdwg.mxu0
    %v1094 = vld [vmem:[#allocation7] sm:$0xf]
    %v1095 = vld [vmem:[#allocation7 + $0x4] sm:$0xf]
    %v1096 = vld [vmem:[#allocation7 + $0x8] sm:$0xf]
    %v1097 = vld [vmem:[#allocation7 + $0xc] sm:$0xf]
    %v1098 = vld [vmem:[#allocation7 + $0x10] sm:$0xf]
    %v1099 = vld [vmem:[#allocation7 + $0x14] sm:$0xf]
    %v1100 = vld [vmem:[#allocation7 + $0x18] sm:$0xf]
    %v1101 = vld [vmem:[#allocation7 + $0x1c] sm:$0xf]
    %v1110 = vcombine.low %v1094, %v1095
    %v1111 = vcombine.low %v1096, %v1097
    %v1113 = vunpack.c.l.s4 1983009808
    %v1114 = vunpack.c.0.s8 %v1113
    %v1115 = vlaneseq
    %v1116 = vshrl.u32 %v1115, 7
    %v1117 = vsub.s32 %v1114, %v1116
    %v1118 = vrot.slane %v1110, %v1117
    %v1120 = vunpack.c.l.s4 1983009808
    %v1121 = vunpack.c.0.s8 %v1120
    %v1122 = vlaneseq
    %v1123 = vshrl.u32 %v1122, 7
    %v1124 = vsub.s32 %v1121, %v1123
    %v1125 = vrot.slane %v1111, %v1124
    %v1126 = vcombine.low %v1118, %v1125
    %v1127 = vcombine.high %v1118, %v1125
    %v1128 = vcombine.low %v1098, %v1099
    %v1129 = vcombine.low %v1100, %v1101
    %v1131 = vunpack.c.l.s4 1983009808
    %v1132 = vunpack.c.0.s8 %v1131
    %v1133 = vlaneseq
    %v1134 = vshrl.u32 %v1133, 7
    %v1135 = vsub.s32 %v1132, %v1134
    %v1136 = vrot.slane %v1128, %v1135
    %v1138 = vunpack.c.l.s4 1983009808
    %v1139 = vunpack.c.0.s8 %v1138
    %v1140 = vlaneseq
    %v1141 = vshrl.u32 %v1140, 7
    %v1142 = vsub.s32 %v1139, %v1141
    %v1143 = vrot.slane %v1129, %v1142
    %v1144 = vcombine.low %v1136, %v1143
    %v1145 = vcombine.high %v1136, %v1143
    %v1150 = vpack.c.bf16 %v1144, %v1126
    %v1151 = vpack.c.bf16 %v1145, %v1127
    %v1152 = vld [vmem:[#allocation11] sm:$0xf]
    %v1153 = vld [vmem:[#allocation11 + $0x4] sm:$0xf]
    %v1154 = vld [vmem:[#allocation11 + $0x8] sm:$0xf]
    %v1155 = vld [vmem:[#allocation11 + $0xc] sm:$0xf]
    %v1156 = vld [vmem:[#allocation11 + $0x10] sm:$0xf]
    %v1157 = vld [vmem:[#allocation11 + $0x14] sm:$0xf]
    %v1158 = vld [vmem:[#allocation11 + $0x18] sm:$0xf]
    %v1159 = vld [vmem:[#allocation11 + $0x1c] sm:$0xf]
    %v1160 = vld [vmem:[#allocation11 + $0x20] sm:$0xf]
    %v1161 = vld [vmem:[#allocation11 + $0x24] sm:$0xf]
    %v1162 = vld [vmem:[#allocation11 + $0x28] sm:$0xf]
    %v1163 = vld [vmem:[#allocation11 + $0x2c] sm:$0xf]
    %v1164 = vld [vmem:[#allocation11 + $0x30] sm:$0xf]
    %v1165 = vld [vmem:[#allocation11 + $0x34] sm:$0xf]
    %v1166 = vld [vmem:[#allocation11 + $0x38] sm:$0xf]
    %v1167 = vld [vmem:[#allocation11 + $0x3c] sm:$0xf]
    %v1168 = vld [vmem:[#allocation11 + $0x40] sm:$0xf]
    %v1169 = vld [vmem:[#allocation11 + $0x44] sm:$0xf]
    %v1170 = vld [vmem:[#allocation11 + $0x48] sm:$0xf]
    %v1171 = vld [vmem:[#allocation11 + $0x4c] sm:$0xf]
    %v1172 = vld [vmem:[#allocation11 + $0x50] sm:$0xf]
    %v1173 = vld [vmem:[#allocation11 + $0x54] sm:$0xf]
    %v1174 = vld [vmem:[#allocation11 + $0x58] sm:$0xf]
    %v1175 = vld [vmem:[#allocation11 + $0x5c] sm:$0xf]
    %v1176 = vld [vmem:[#allocation11 + $0x60] sm:$0xf]
    %v1177 = vld [vmem:[#allocation11 + $0x64] sm:$0xf]
    %v1178 = vld [vmem:[#allocation11 + $0x68] sm:$0xf]
    %v1179 = vld [vmem:[#allocation11 + $0x6c] sm:$0xf]
    %v1180 = vld [vmem:[#allocation11 + $0x70] sm:$0xf]
    %v1181 = vld [vmem:[#allocation11 + $0x74] sm:$0xf]
    %v1182 = vld [vmem:[#allocation11 + $0x78] sm:$0xf]
    %v1183 = vld [vmem:[#allocation11 + $0x7c] sm:$0xf]
    %v1216 = vunpack.c.l.b16 %v1152
    %v1217 = vunpack.c.l.b16 %v1153
    %v1218 = vunpack.c.l.b16 %v1154
    %v1219 = vunpack.c.l.b16 %v1155
    %v1220 = vunpack.c.l.b16 %v1156
    %v1221 = vunpack.c.l.b16 %v1157
    %v1222 = vunpack.c.l.b16 %v1158
    %v1223 = vunpack.c.l.b16 %v1159
    %v1224 = vunpack.c.l.b16 %v1160
    %v1225 = vunpack.c.l.b16 %v1161
    %v1226 = vunpack.c.l.b16 %v1162
    %v1227 = vunpack.c.l.b16 %v1163
    %v1228 = vunpack.c.l.b16 %v1164
    %v1229 = vunpack.c.l.b16 %v1165
    %v1230 = vunpack.c.l.b16 %v1166
    %v1231 = vunpack.c.l.b16 %v1167
    %v1232 = vunpack.c.l.b16 %v1168
    %v1233 = vunpack.c.l.b16 %v1169
    %v1234 = vunpack.c.l.b16 %v1170
    %v1235 = vunpack.c.l.b16 %v1171
    %v1236 = vunpack.c.l.b16 %v1172
    %v1237 = vunpack.c.l.b16 %v1173
    %v1238 = vunpack.c.l.b16 %v1174
    %v1239 = vunpack.c.l.b16 %v1175
    %v1240 = vunpack.c.l.b16 %v1176
    %v1241 = vunpack.c.l.b16 %v1177
    %v1242 = vunpack.c.l.b16 %v1178
    %v1243 = vunpack.c.l.b16 %v1179
    %v1244 = vunpack.c.l.b16 %v1180
    %v1245 = vunpack.c.l.b16 %v1181
    %v1246 = vunpack.c.l.b16 %v1182
    %v1247 = vunpack.c.l.b16 %v1183
    %v1248 = vpack.c.b16 %v1217, %v1216
    %v1249 = vpack.c.b16 %v1219, %v1218
    %v1250 = vpack.c.b16 %v1221, %v1220
    %v1251 = vpack.c.b16 %v1223, %v1222
    %v1252 = vpack.c.b16 %v1225, %v1224
    %v1253 = vpack.c.b16 %v1227, %v1226
    %v1254 = vpack.c.b16 %v1229, %v1228
    %v1255 = vpack.c.b16 %v1231, %v1230
    %v1256 = vpack.c.b16 %v1233, %v1232
    %v1257 = vpack.c.b16 %v1235, %v1234
    %v1258 = vpack.c.b16 %v1237, %v1236
    %v1259 = vpack.c.b16 %v1239, %v1238
    %v1260 = vpack.c.b16 %v1241, %v1240
    %v1261 = vpack.c.b16 %v1243, %v1242
    %v1262 = vpack.c.b16 %v1245, %v1244
    %v1263 = vpack.c.b16 %v1247, %v1246
    %1280 = vmatprep.subr.bf16.mxu0 0
    %1281 = vmatpush1.bf16.msra.mxu0 %v1255
    %1282 = vmatprep.subr.bf16.mxu0 0
    %1283 = vmatpush1.bf16.msra.mxu0 %v1254
    %1284 = vmatprep.subr.bf16.mxu0 0
    %1285 = vmatpush1.bf16.msra.mxu0 %v1253
    %1286 = vmatprep.subr.bf16.mxu0 0
    %1287 = vmatpush1.bf16.msra.mxu0 %v1252
    %1288 = vmatprep.subr.bf16.mxu0 0
    %1289 = vmatpush1.bf16.msra.mxu0 %v1251
    %1290 = vmatprep.subr.bf16.mxu0 0
    %1291 = vmatpush1.bf16.msra.mxu0 %v1250
    %1292 = vmatprep.subr.bf16.mxu0 0
    %1293 = vmatpush1.bf16.msra.mxu0 %v1249
    %1294 = vmatprep.subr.bf16.mxu0 0
    %1295 = vmatpush1.bf16.msra.mxu0 %v1248
    %1296 = vmatprep.subr.bf16.mxu0 0
    %1297 = vmatpush2.bf16.msra.mxu0 %v1263
    %1298 = vmatprep.subr.bf16.mxu0 0
    %1299 = vmatpush2.bf16.msra.mxu0 %v1262
    %1300 = vmatprep.subr.bf16.mxu0 0
    %1301 = vmatpush2.bf16.msra.mxu0 %v1261
    %1302 = vmatprep.subr.bf16.mxu0 0
    %1303 = vmatpush2.bf16.msra.mxu0 %v1260
    %1304 = vmatprep.subr.bf16.mxu0 0
    %1305 = vmatpush2.bf16.msra.mxu0 %v1259
    %1306 = vmatprep.subr.bf16.mxu0 0
    %1307 = vmatpush2.bf16.msra.mxu0 %v1258
    %1308 = vmatprep.subr.bf16.mxu0 0
    %1309 = vmatpush2.bf16.msra.mxu0 %v1257
    %1310 = vmatprep.subr.bf16.mxu0 0
    %1311 = vmatpush2.bf16.msra.mxu0 %v1256
    %1312 = vmatprep.mubr.bf16.mxu0 %v1151
    %1313 = vmatmul.mubr.bf16.gmra.mxu0 %v1150
    %v1314 = vpop.f32.mrf.mxu0
    %v1315 = vadd.f32 0.0, %v1314
    %v1316 = vpop.f32.mrf.mxu0
    %v1317 = vpop.f32.mrf.mxu0
    %v1318 = vadd.f32 0.0, %v1317
    %v1319 = vpop.f32.mrf.mxu0
    %1320 = vdwg.mxu0
    %v1321 = vadd.f32 %v1088, %v1315
    %v1322 = vadd.f32 %v1091, %v1318
    %v1323 = vld [vmem:[%s6] sm:$0x1]
    %v1325 = vlaneseq
    %v1326 = vshrl.u32 %v1325, 7
    %v1327 = vsub.s32 0, %v1326
    %v1328 = vrot.slane %v1323, %v1327
    %v1330 = vadd.f32 %v1321, %v1328
    %v1331 = vadd.f32 %v1322, %v1328
    %1332 = vst [vmem:[#allocation13] sm:$0xff] %v1330
    %1333 = vst [vmem:[#allocation13 + $0x8] sm:$0xff] %v1331
    // Predicated region
    $region54: #{tpu_custom_call.1} parent=1 // pred_check
      _
    $region55: #{tpu_custom_call.1} parent=1 // pred_check_branch
      %1335 = sbr.rel (0) target = $region57
    $region56: #{tpu_custom_call.1} parent=1 // pred_region
      %s1337 = ssub.s32 256, 32
      %1338 = vsyncadd [#allocation4], %s1337
      %s1339 = sshll.u32 [#allocation13], 4
      %s1340 = int_to_ptr.vmem [resolvable:$true] %s1339
      %1345 = dma.vmem_to_hbm [thread:$0]  %s1340, 32, %s7, [#allocation4], 32, 32, 2
    $region57: #{tpu_custom_call.1} parent=1 // pred_fallthru
      _
    // Predicated region
    $region58: #{tpu_custom_call.1} parent=1 // pred_check
      _
    $region59: #{tpu_custom_call.1} parent=1 // pred_check_branch
      %1347 = sbr.rel (0) target = $region61
    $region60: #{tpu_custom_call.1} parent=1 // pred_region
      %1348 = dma.done [#allocation4], 256
    $region61: #{tpu_custom_call.1} parent=1 // pred_fallthru
      _
    %1349 = vsyncpa [#allocation3], 1
    %1350 = vsyncpa [#allocation6], 1
    %1351 = vsyncpa [#allocation9], 1
    %1352 = vsyncpa [#allocation12], 1
    %1353 = vsyncpa [#allocation4], 1

</llo_original>
